<compile_context>
chip_gen: v5e
topology: v5e:2x2
jax: 0.10.0
libtpu: 0.0.40
codegen_flags: <defaults>
</compile_context>

<pallas_src>
import functools

import jax
import jax.numpy as jnp
from jax import lax
from jax.experimental import pallas as pl
from jax.experimental.pallas import tpu as pltpu


_T_DIMS = (((0,), (0,)), ((), ()))   # contract the edge axis:  A^T @ B


def _leaky_relu(x):
    return jnp.where(x > 0.0, x, 0.01 * x)   # torch.nn.LeakyReLU default slope


# --------------------------------------------------------------------------- #
# Fused Pallas kernel
# --------------------------------------------------------------------------- #
def _gat_kernel(x_ref, r_ref, c_ref,
                w1_ref, b1_ref, a1_ref,
                w2_ref, b2_ref, a2_ref,
                o_ref,
                xlin1, s1_1, s2_1, eall1, hacc,
                xlin2, s1_2, s2_2, eall2, outacc,
                *, n_heads, fh):
    phase = pl.program_id(0)
    et = pl.program_id(1)
    first_tile = et == 0
    last_tile = et == pl.num_programs(1) - 1
    bf16, f32 = jnp.bfloat16, jnp.float32

    r = r_ref[...]        # (E_TILE, N) bf16  source (row) one-hot tile
    c = c_ref[...]        # (E_TILE, N) bf16  target (col) one-hot tile

    # ------------------------- layer 1 (4 fused heads) ------------------------- #
    @pl.when(jnp.logical_and(phase == 0, first_tile))
    def _():
        xl = jnp.dot(x_ref[...], w1_ref[...], preferred_element_type=f32) + b1_ref[...]
        xlin1[...] = xl                                                   # (N, FT1)
        s = jnp.dot(xl, a1_ref[...], preferred_element_type=f32)         # (N, 2H) [a_src|a_dst]
        s1_1[...] = s[:, :n_heads]
        s2_1[...] = s[:, n_heads:]
        eall1[...] = jnp.zeros_like(eall1)

    @pl.when(phase == 0)   # pass 1: accumulate per-source-node softmax denominators
    def _():
        logits = (jnp.dot(r, s1_1[...].astype(bf16), preferred_element_type=f32)
                  + jnp.dot(c, s2_1[...].astype(bf16), preferred_element_type=f32))
        exp_e = jnp.exp(_leaky_relu(logits))                              # (ET, H)
        eall1[...] += lax.dot_general(r, exp_e.astype(bf16), _T_DIMS,
                                      preferred_element_type=f32)         # (N, H)

    @pl.when(jnp.logical_and(phase == 1, first_tile))
    def _():
        hacc[...] = jnp.zeros_like(hacc)

    @pl.when(phase == 1)   # pass 2: normalized messages, scatter-add at target nodes
    def _():
        # Single fused R gather: [s1 | e_all | x_lin]  (one E x N MXU pass, bf16).
        rhs = jnp.concatenate([s1_1[...], eall1[...], xlin1[...]], axis=1).astype(bf16)
        g = jnp.dot(r, rhs, preferred_element_type=f32)                   # (ET, 2H+FT1)
        s1_g = g[:, :n_heads]
        denom = g[:, n_heads:2 * n_heads]
        x_row = g[:, 2 * n_heads:]
        s2_g = jnp.dot(c, s2_1[...].astype(bf16), preferred_element_type=f32)
        exp_e = jnp.exp(_leaky_relu(s1_g + s2_g))                         # (ET, H)
        denom = jnp.where(denom == 0.0, 1.0, denom)                       # zero-padded edges
        e_norm = exp_e * pl.reciprocal(denom, approx=True)                # (ET, H)
        # Per-head broadcast on the VPU (replaces the old K=H selector matmul).
        cols = [x_row[:, hh * fh:(hh + 1) * fh] * e_norm[:, hh:hh + 1]
                for hh in range(n_heads)]
        msg = jnp.concatenate(cols, axis=1)                               # (ET, FT1)
        hacc[...] += lax.dot_general(c, msg.astype(bf16), _T_DIMS,
                                     preferred_element_type=f32)          # (N, FT1)

    # ------------------------------ layer 2 (out_att) ------------------------------ #
    @pl.when(jnp.logical_and(phase == 2, first_tile))
    def _():
        # TODO(synk): F.dropout between the layers is stochastic; eval-mode identity here.
        xl = jnp.dot(hacc[...], w2_ref[...], preferred_element_type=f32) + b2_ref[...]
        xlin2[...] = xl                                                   # (N, F2)
        s = jnp.dot(xl, a2_ref[...], preferred_element_type=f32)         # (N, 2)
        s1_2[...] = s[:, :1]
        s2_2[...] = s[:, 1:]
        eall2[...] = jnp.zeros_like(eall2)

    @pl.when(phase == 2)
    def _():
        logits = (jnp.dot(r, s1_2[...].astype(bf16), preferred_element_type=f32)
                  + jnp.dot(c, s2_2[...].astype(bf16), preferred_element_type=f32))
        exp_e = jnp.exp(_leaky_relu(logits))                              # (ET, 1)
        eall2[...] += lax.dot_general(r, exp_e.astype(bf16), _T_DIMS,
                                      preferred_element_type=f32)         # (N, 1)

    @pl.when(jnp.logical_and(phase == 3, first_tile))
    def _():
        outacc[...] = jnp.zeros_like(outacc)

    @pl.when(phase == 3)
    def _():
        rhs = jnp.concatenate([s1_2[...], eall2[...], xlin2[...]], axis=1).astype(bf16)
        g = jnp.dot(r, rhs, preferred_element_type=f32)                   # (ET, 2+F2)
        s1_g = g[:, :1]
        denom = g[:, 1:2]
        x_row = g[:, 2:]
        s2_g = jnp.dot(c, s2_2[...].astype(bf16), preferred_element_type=f32)
        exp_e = jnp.exp(_leaky_relu(s1_g + s2_g))                         # (ET, 1)
        denom = jnp.where(denom == 0.0, 1.0, denom)
        e_norm = exp_e * pl.reciprocal(denom, approx=True)
        msg = x_row * e_norm                                              # broadcast over F2
        outacc[...] += lax.dot_general(c, msg.astype(bf16), _T_DIMS,
                                       preferred_element_type=f32)        # (N, F2)

    # ------------------------------ fused epilogue ------------------------------ #
    @pl.when(jnp.logical_and(phase == 3, last_tile))
    def _():
        out = outacc[...]
        y = jnp.where(out > 0.0, out, jnp.exp(out) - 1.0)                 # ELU
        y = y - jnp.max(y, axis=1, keepdims=True)
        ey = jnp.exp(y)
        o_ref[...] = ey / jnp.sum(ey, axis=1, keepdims=True)              # exact divide


# --------------------------------------------------------------------------- #
# Wrapper
# --------------------------------------------------------------------------- #
def _full_spec(shape):
    nd = len(shape)
    return pl.BlockSpec(shape, lambda p, t, _nd=nd: (0,) * _nd)


def _stack_head_params(head_params):
    """Fuse per-head GAL params: concat W/b; block-diagonal [a_src | a_dst]."""
    n_heads = len(head_params)
    fh = head_params[0]["w"].shape[1]
    w = jnp.concatenate([p["w"] for p in head_params], axis=1)            # (Fin, H*Fh)
    b = jnp.concatenate([p["b"] for p in head_params], axis=1)            # (1, H*Fh)
    a = jnp.zeros((n_heads * fh, 2 * n_heads), jnp.float32)
    for h, p in enumerate(head_params):
        a = a.at[h * fh:(h + 1) * fh, h].set(p["a"][:fh, 0])
        a = a.at[h * fh:(h + 1) * fh, n_heads + h].set(p["a"][fh:, 0])
    return w, b, a, n_heads, fh


def gat_forward(params, x, adj, *, e_tile=16):
    """GATLay.forward: 4-head GAL -> dropout(eval) -> out GAL -> ELU -> softmax."""
    row, col = adj[0], adj[1]
    n = x.shape[0]
    e = row.shape[0]
    n_tiles = max(1, -(-e // e_tile))
    e_pad = n_tiles * e_tile
    if e_pad != e:
        # Out-of-range index -> all-zero one-hot row -> padded edges are exact no-ops.
        pad = jnp.full((e_pad - e,), n, row.dtype)
        row = jnp.concatenate([row, pad])
        col = jnp.concatenate([col, pad])

    # bf16 one-hot incidence (0/1 exact): half the HBM bytes, native bf16 MXU path.
    r = jax.nn.one_hot(row, n, dtype=jnp.bfloat16)                        # (E_pad, N)
    c = jax.nn.one_hot(col, n, dtype=jnp.bfloat16)                        # (E_pad, N)

    w1, b1, a1, n_heads, fh = _stack_head_params(params["attentions"])
    ft1 = n_heads * fh
    po = params["out_att"]
    f2 = po["w"].shape[1]
    w2, b2 = po["w"], po["b"]
    a2 = jnp.concatenate([po["a"][:f2, :], po["a"][f2:, :]], axis=1)      # (F2, 2)
    nfeat = x.shape[1]

    edge_spec = pl.BlockSpec((e_tile, n), lambda p, t: (t, 0))
    in_specs = ([_full_spec(x.shape), edge_spec, edge_spec]
                + [_full_spec(a.shape) for a in (w1, b1, a1, w2, b2, a2)])

    # Advisory cost hint so XLA schedules the one-hot build / param stacking around us.
    mxu_width = (3 * n_heads) + (2 * n_heads + ft1) + n_heads + ft1 + 3 + (2 + f2) + 1 + f2
    cost = pl.CostEstimate(
        flops=int(2 * e_pad * n * mxu_width
                  + 2 * n * (nfeat * ft1 + ft1 * 2 * n_heads + ft1 * f2 + f2 * 2)),
        transcendentals=int(2 * e_pad * (n_heads + 1) + 2 * n * f2),
        bytes_accessed=int(4 * e_pad * n * 2 * 2
                           + 4 * (x.size + w1.size + b1.size + a1.size
                                  + w2.size + b2.size + a2.size + n * f2)),
    )

    kernel = functools.partial(_gat_kernel, n_heads=n_heads, fh=fh)
    return pl.pallas_call(
        kernel,
        out_shape=jax.ShapeDtypeStruct((n, f2), jnp.float32),
        grid_spec=pltpu.PrefetchScalarGridSpec(
            num_scalar_prefetch=0,
            grid=(4, n_tiles),                      # (phase, edge tile); tiles innermost
            in_specs=in_specs,
            out_specs=_full_spec((n, f2)),
            scratch_shapes=[
                pltpu.VMEM((n, ft1), jnp.float32),      # xlin1
                pltpu.VMEM((n, n_heads), jnp.float32),  # s1_1
                pltpu.VMEM((n, n_heads), jnp.float32),  # s2_1
                pltpu.VMEM((n, n_heads), jnp.float32),  # eall1
                pltpu.VMEM((n, ft1), jnp.float32),      # hacc (layer-1 output)
                pltpu.VMEM((n, f2), jnp.float32),       # xlin2
                pltpu.VMEM((n, 1), jnp.float32),        # s1_2
                pltpu.VMEM((n, 1), jnp.float32),        # s2_2
                pltpu.VMEM((n, 1), jnp.float32),        # eall2
                pltpu.VMEM((n, f2), jnp.float32),       # outacc
            ]),
        compiler_params=pltpu.CompilerParams(
            # TODO(synk): make the edge-tile axis "parallel" (per-core accumulators +
            # reduction) to use both v7x TensorCores; both axes carry scratch deps today.
            dimension_semantics=("arbitrary", "arbitrary"),
            vmem_limit_bytes=32 * 1024 * 1024),
        cost_estimate=cost,
    )(x, r, c, w1, b1, a1, w2, b2, a2)


# --------------------------------------------------------------------------- #
# Deterministic parameter init (matches the __init__ shapes of the module)
# --------------------------------------------------------------------------- #
def _xavier_uniform(key, shape, gain=1.0):
    fan_out, fan_in = shape[0], shape[1]
    bound = gain * jnp.sqrt(6.0 / (fan_in + fan_out))
    return jax.random.uniform(key, shape, jnp.float32, -bound, bound)


def init_gal_params(key, in_features, out_features):
    k_w, k_b, k_a = jax.random.split(key, 3)
    w = _xavier_uniform(k_w, (out_features, in_features))          # torch Linear weight
    bound = 1.0 / jnp.sqrt(jnp.float32(in_features))
    b = jax.random.uniform(k_b, (1, out_features), jnp.float32, -bound, bound)
    a = _xavier_uniform(k_a, (2 * out_features, 1), gain=1.414)    # attention vector
    return {"w": jnp.asarray(w.T), "b": b, "a": a}                 # w stored (Fin, Fout)


def init_gat_params(key, nfeat, nhid, nhid2, n_heads=4):
    keys = jax.random.split(key, n_heads + 1)
    attentions = [init_gal_params(keys[i], nfeat, nhid) for i in range(n_heads)]
    out_att = init_gal_params(keys[-1], nhid * n_heads, nhid2)
    return {"attentions": attentions, "out_att": out_att}


# --------------------------------------------------------------------------- #
# Pure-JAX reference (mirrors the PyTorch module) for a correctness check
# --------------------------------------------------------------------------- #
def _gal_ref(x, p, row, col, n):
    f = p["w"].shape[1]
    x_lin = x @ p["w"] + p["b"]
    xr, xc = x_lin[row], x_lin[col]
    t = xr @ p["a"][:f, :] + xc @ p["a"][f:, :]
    e = jnp.where(t > 0, t, 0.01 * t)[:, 0]
    exp_e = jnp.exp(e)
    e_all = jnp.zeros((n,), jnp.float32).at[row].add(exp_e)
    norm = exp_e / e_all[row]
    return jnp.zeros((n, f), jnp.float32).at[col].add(norm[:, None] * xr)


def _gat_ref(params, x, adj):
    row, col = adj[0], adj[1]
    n = x.shape[0]
    h = jnp.concatenate(
        [_gal_ref(x, p, row, col, n) for p in params["attentions"]], axis=1)
    out = _gal_ref(h, params["out_att"], row, col, n)
    y = jnp.where(out > 0, out, jnp.exp(out) - 1.0)
    return jax.nn.softmax(y, axis=1)


# --------------------------------------------------------------------------- #
# Demo
# --------------------------------------------------------------------------- #
if __name__ == "__main__":
    key = jax.random.PRNGKey(0)
    k_x, k_e, k_p = jax.random.split(key, 3)

    N, E = 8, 40            # nodes, edges (E not a tile multiple -> exercises padding)
    nfeat, nhid, nhid2, n_heads = 16, 8, 4, 4

    x = jax.random.normal(k_x, (N, nfeat), jnp.float32)
    adj = jax.random.randint(k_e, (2, E), 0, N, dtype=jnp.int32)   # edge_index (2, E)
    params = init_gat_params(k_p, nfeat, nhid, nhid2, n_heads=n_heads)

    out = jax.block_until_ready(gat_forward(params, x, adj, e_tile=16))
    ref = jax.block_until_ready(_gat_ref(params, x, adj))

    assert out.shape == (N, nhid2)
    assert bool(jnp.all(jnp.isfinite(out)))
    assert bool(jnp.allclose(out, ref, atol=5e-2, rtol=5e-2)), \
        f"max abs err {float(jnp.max(jnp.abs(out - ref)))}"
    print("KERNEL_OK")
</pallas_src>

<mosaic_0001>
module attributes {stable_mosaic.version = 11 : i64} {
  func.func @_gat_kernel(%arg0: i32, %arg1: i32, %arg2: memref<8x16xf32, #tpu.memory_space<vmem>>, %arg3: memref<16x8xbf16, #tpu.memory_space<vmem>>, %arg4: memref<16x8xbf16, #tpu.memory_space<vmem>>, %arg5: memref<16x32xf32, #tpu.memory_space<vmem>>, %arg6: memref<1x32xf32, #tpu.memory_space<vmem>>, %arg7: memref<32x8xf32, #tpu.memory_space<vmem>>, %arg8: memref<32x4xf32, #tpu.memory_space<vmem>>, %arg9: memref<1x4xf32, #tpu.memory_space<vmem>>, %arg10: memref<4x2xf32, #tpu.memory_space<vmem>>, %arg11: memref<8x4xf32, #tpu.memory_space<vmem>>, %arg12: memref<8x32xf32, #tpu.memory_space<vmem>>, %arg13: memref<8x4xf32, #tpu.memory_space<vmem>>, %arg14: memref<8x4xf32, #tpu.memory_space<vmem>>, %arg15: memref<8x4xf32, #tpu.memory_space<vmem>>, %arg16: memref<8x32xf32, #tpu.memory_space<vmem>>, %arg17: memref<8x4xf32, #tpu.memory_space<vmem>>, %arg18: memref<8x1xf32, #tpu.memory_space<vmem>>, %arg19: memref<8x1xf32, #tpu.memory_space<vmem>>, %arg20: memref<8x1xf32, #tpu.memory_space<vmem>>, %arg21: memref<8x4xf32, #tpu.memory_space<vmem>>) attributes {dimension_semantics = [#tpu.dimension_semantics<arbitrary>, #tpu.dimension_semantics<arbitrary>], iteration_bounds = array<i64: 4, 3>, scalar_prefetch = 0 : i64, scratch_operands = 10 : i64, tpu.core_type = #tpu.core_type<tc>, window_params = [{pipeline_mode = #tpu.pipeline_mode<synchronous>, transform_indices = @transform_0, window_bounds = array<i64: 8, 16>}, {transform_indices = @transform_1, window_bounds = array<i64: 16, 8>}, {transform_indices = @transform_2, window_bounds = array<i64: 16, 8>}, {pipeline_mode = #tpu.pipeline_mode<synchronous>, transform_indices = @transform_3, window_bounds = array<i64: 16, 32>}, {pipeline_mode = #tpu.pipeline_mode<synchronous>, transform_indices = @transform_4, window_bounds = array<i64: 1, 32>}, {pipeline_mode = #tpu.pipeline_mode<synchronous>, transform_indices = @transform_5, window_bounds = array<i64: 32, 8>}, {pipeline_mode = #tpu.pipeline_mode<synchronous>, transform_indices = @transform_6, window_bounds = array<i64: 32, 4>}, {pipeline_mode = #tpu.pipeline_mode<synchronous>, transform_indices = @transform_7, window_bounds = array<i64: 1, 4>}, {pipeline_mode = #tpu.pipeline_mode<synchronous>, transform_indices = @transform_8, window_bounds = array<i64: 4, 2>}, {pipeline_mode = #tpu.pipeline_mode<synchronous>, transform_indices = @transform_9, window_bounds = array<i64: 8, 4>}]} {
    %c0_i32 = arith.constant 0 : i32
    %0 = arith.cmpi eq, %arg1, %c0_i32 : i32
    %c2_i32 = arith.constant 2 : i32
    %1 = arith.cmpi eq, %arg1, %c2_i32 : i32
    %c0 = arith.constant 0 : index
    %c0_0 = arith.constant 0 : index
    %2 = vector.load %arg3[%c0, %c0_0] : memref<16x8xbf16, #tpu.memory_space<vmem>>, vector<16x8xbf16>
    %c0_1 = arith.constant 0 : index
    %c0_2 = arith.constant 0 : index
    %3 = vector.load %arg4[%c0_1, %c0_2] : memref<16x8xbf16, #tpu.memory_space<vmem>>, vector<16x8xbf16>
    %c0_i32_3 = arith.constant 0 : i32
    %4 = arith.cmpi eq, %arg0, %c0_i32_3 : i32
    %5 = arith.andi %4, %0 : i1
    %6 = arith.extui %5 : i1 to i32
    %c0_i32_4 = arith.constant 0 : i32
    %7 = arith.cmpi ne, %6, %c0_i32_4 : i32
    scf.if %7 {
      %c0_19 = arith.constant 0 : index
      %c0_20 = arith.constant 0 : index
      %36 = vector.load %arg2[%c0_19, %c0_20] : memref<8x16xf32, #tpu.memory_space<vmem>>, vector<8x16xf32>
      %c0_21 = arith.constant 0 : index
      %c0_22 = arith.constant 0 : index
      %37 = vector.load %arg5[%c0_21, %c0_22] : memref<16x32xf32, #tpu.memory_space<vmem>>, vector<16x32xf32>
      %cst = arith.constant dense<0.000000e+00> : vector<8x32xf32>
      %38 = tpu.matmul %36, %37, %cst {dimension_numbers = #tpu.dot_dimension_numbers<[1], [0], [0], [1], [0, 0, 1, 1], [], []>} : vector<8x16xf32>, vector<16x32xf32>, vector<8x32xf32> -> vector<8x32xf32>
      %c0_23 = arith.constant 0 : index
      %c0_24 = arith.constant 0 : index
      %39 = vector.load %arg6[%c0_23, %c0_24] : memref<1x32xf32, #tpu.memory_space<vmem>>, vector<1x32xf32>
      %40 = vector.broadcast %39 : vector<1x32xf32> to vector<8x32xf32>
      %41 = arith.addf %38, %40 : vector<8x32xf32>
      %c0_25 = arith.constant 0 : index
      %c0_26 = arith.constant 0 : index
      %42 = vector.load %arg12[%c0_25, %c0_26] : memref<8x32xf32, #tpu.memory_space<vmem>>, vector<8x32xf32>
      tpu.vector_store %arg12[%c0_25, %c0_26], %41 {strides = array<i32>} : memref<8x32xf32, #tpu.memory_space<vmem>>, vector<8x32xf32>,
      %c0_27 = arith.constant 0 : index
      %c0_28 = arith.constant 0 : index
      %43 = vector.load %arg7[%c0_27, %c0_28] : memref<32x8xf32, #tpu.memory_space<vmem>>, vector<32x8xf32>
      %cst_29 = arith.constant dense<0.000000e+00> : vector<8x8xf32>
      %44 = tpu.matmul %41, %43, %cst_29 {dimension_numbers = #tpu.dot_dimension_numbers<[1], [0], [0], [1], [0, 0, 1, 1], [], []>} : vector<8x32xf32>, vector<32x8xf32>, vector<8x8xf32> -> vector<8x8xf32>
      %45 = vector.extract_strided_slice %44 {offsets = [0, 0], sizes = [8, 4], strides = [1, 1]} : vector<8x8xf32> to vector<8x4xf32>
      %c0_30 = arith.constant 0 : index
      %c0_31 = arith.constant 0 : index
      %46 = vector.load %arg13[%c0_30, %c0_31] : memref<8x4xf32, #tpu.memory_space<vmem>>, vector<8x4xf32>
      tpu.vector_store %arg13[%c0_30, %c0_31], %45 {strides = array<i32>} : memref<8x4xf32, #tpu.memory_space<vmem>>, vector<8x4xf32>,
      %47 = vector.extract_strided_slice %44 {offsets = [0, 4], sizes = [8, 4], strides = [1, 1]} : vector<8x8xf32> to vector<8x4xf32>
      %c0_32 = arith.constant 0 : index
      %c0_33 = arith.constant 0 : index
      %48 = vector.load %arg14[%c0_32, %c0_33] : memref<8x4xf32, #tpu.memory_space<vmem>>, vector<8x4xf32>
      tpu.vector_store %arg14[%c0_32, %c0_33], %47 {strides = array<i32>} : memref<8x4xf32, #tpu.memory_space<vmem>>, vector<8x4xf32>,
      %cst_34 = arith.constant 0.000000e+00 : f32
      %49 = vector.broadcast %cst_34 : f32 to vector<8x4xf32>
      %c0_35 = arith.constant 0 : index
      %c0_36 = arith.constant 0 : index
      %50 = vector.load %arg15[%c0_35, %c0_36] : memref<8x4xf32, #tpu.memory_space<vmem>>, vector<8x4xf32>
      tpu.vector_store %arg15[%c0_35, %c0_36], %49 {strides = array<i32>} : memref<8x4xf32, #tpu.memory_space<vmem>>, vector<8x4xf32>,
    } else {
    }
    %c0_i32_5 = arith.constant 0 : i32
    %8 = arith.cmpi eq, %arg0, %c0_i32_5 : i32
    %9 = arith.extui %8 : i1 to i32
    %c0_i32_6 = arith.constant 0 : i32
    %10 = arith.cmpi ne, %9, %c0_i32_6 : i32
    scf.if %10 {
      %c0_19 = arith.constant 0 : index
      %c0_20 = arith.constant 0 : index
      %36 = vector.load %arg13[%c0_19, %c0_20] : memref<8x4xf32, #tpu.memory_space<vmem>>, vector<8x4xf32>
      %37 = arith.truncf %36 : vector<8x4xf32> to vector<8x4xbf16>
      %cst = arith.constant dense<0.000000e+00> : vector<16x4xf32>
      %38 = tpu.matmul %2, %37, %cst {dimension_numbers = #tpu.dot_dimension_numbers<[1], [0], [0], [1], [0, 0, 1, 1], [], []>} : vector<16x8xbf16>, vector<8x4xbf16>, vector<16x4xf32> -> vector<16x4xf32>
      %c0_21 = arith.constant 0 : index
      %c0_22 = arith.constant 0 : index
      %39 = vector.load %arg14[%c0_21, %c0_22] : memref<8x4xf32, #tpu.memory_space<vmem>>, vector<8x4xf32>
      %40 = arith.truncf %39 : vector<8x4xf32> to vector<8x4xbf16>
      %cst_23 = arith.constant dense<0.000000e+00> : vector<16x4xf32>
      %41 = tpu.matmul %3, %40, %cst_23 {dimension_numbers = #tpu.dot_dimension_numbers<[1], [0], [0], [1], [0, 0, 1, 1], [], []>} : vector<16x8xbf16>, vector<8x4xbf16>, vector<16x4xf32> -> vector<16x4xf32>
      %42 = arith.addf %38, %41 : vector<16x4xf32>
      %cst_24 = arith.constant 0.000000e+00 : f32
      %43 = vector.broadcast %cst_24 : f32 to vector<16x4xf32>
      %44 = arith.cmpf ogt, %42, %43 : vector<16x4xf32>
      %cst_25 = arith.constant 0.00999999977 : f32
      %45 = vector.broadcast %cst_25 : f32 to vector<16x4xf32>
      %46 = arith.mulf %45, %42 : vector<16x4xf32>
      %47 = arith.select %44, %42, %46 : vector<16x4xi1>, vector<16x4xf32>
      %48 = math.exp %47 : vector<16x4xf32>
      %c0_26 = arith.constant 0 : index
      %c0_27 = arith.constant 0 : index
      %49 = vector.load %arg15[%c0_26, %c0_27] : memref<8x4xf32, #tpu.memory_space<vmem>>, vector<8x4xf32>
      %50 = arith.truncf %48 : vector<16x4xf32> to vector<16x4xbf16>
      %cst_28 = arith.constant dense<0.000000e+00> : vector<8x4xf32>
      %51 = tpu.matmul %2, %50, %cst_28 {dimension_numbers = #tpu.dot_dimension_numbers<[0], [0], [1], [1], [0, 1, 1, 1], [], []>} : vector<16x8xbf16>, vector<16x4xbf16>, vector<8x4xf32> -> vector<8x4xf32>
      %52 = arith.addf %49, %51 : vector<8x4xf32>
      %c0_29 = arith.constant 0 : index
      %c0_30 = arith.constant 0 : index
      %53 = vector.load %arg15[%c0_29, %c0_30] : memref<8x4xf32, #tpu.memory_space<vmem>>, vector<8x4xf32>
      tpu.vector_store %arg15[%c0_29, %c0_30], %52 {strides = array<i32>} : memref<8x4xf32, #tpu.memory_space<vmem>>, vector<8x4xf32>,
    } else {
    }
    %c1_i32 = arith.constant 1 : i32
    %11 = arith.cmpi eq, %arg0, %c1_i32 : i32
    %12 = arith.andi %11, %0 : i1
    %13 = arith.extui %12 : i1 to i32
    %c0_i32_7 = arith.constant 0 : i32
    %14 = arith.cmpi ne, %13, %c0_i32_7 : i32
    scf.if %14 {
      %cst = arith.constant 0.000000e+00 : f32
      %36 = vector.broadcast %cst : f32 to vector<8x32xf32>
      %c0_19 = arith.constant 0 : index
      %c0_20 = arith.constant 0 : index
      %37 = vector.load %arg16[%c0_19, %c0_20] : memref<8x32xf32, #tpu.memory_space<vmem>>, vector<8x32xf32>
      tpu.vector_store %arg16[%c0_19, %c0_20], %36 {strides = array<i32>} : memref<8x32xf32, #tpu.memory_space<vmem>>, vector<8x32xf32>,
    } else {
    }
    %c1_i32_8 = arith.constant 1 : i32
    %15 = arith.cmpi eq, %arg0, %c1_i32_8 : i32
    %16 = arith.extui %15 : i1 to i32
    %c0_i32_9 = arith.constant 0 : i32
    %17 = arith.cmpi ne, %16, %c0_i32_9 : i32
    scf.if %17 {
      %c0_19 = arith.constant 0 : index
      %c0_20 = arith.constant 0 : index
      %36 = vector.load %arg13[%c0_19, %c0_20] : memref<8x4xf32, #tpu.memory_space<vmem>>, vector<8x4xf32>
      %c0_21 = arith.constant 0 : index
      %c0_22 = arith.constant 0 : index
      %37 = vector.load %arg15[%c0_21, %c0_22] : memref<8x4xf32, #tpu.memory_space<vmem>>, vector<8x4xf32>
      %c0_23 = arith.constant 0 : index
      %c0_24 = arith.constant 0 : index
      %38 = vector.load %arg12[%c0_23, %c0_24] : memref<8x32xf32, #tpu.memory_space<vmem>>, vector<8x32xf32>
      %39 = tpu.concatenate %36, %37, %38 in 1 : vector<8x4xf32>, vector<8x4xf32>, vector<8x32xf32> -> vector<8x40xf32>
      %40 = arith.truncf %39 : vector<8x40xf32> to vector<8x40xbf16>
      %cst = arith.constant dense<0.000000e+00> : vector<16x40xf32>
      %41 = tpu.matmul %2, %40, %cst {dimension_numbers = #tpu.dot_dimension_numbers<[1], [0], [0], [1], [0, 0, 1, 1], [], []>} : vector<16x8xbf16>, vector<8x40xbf16>, vector<16x40xf32> -> vector<16x40xf32>
      %42 = vector.extract_strided_slice %41 {offsets = [0, 0], sizes = [16, 4], strides = [1, 1]} : vector<16x40xf32> to vector<16x4xf32>
      %43 = vector.extract_strided_slice %41 {offsets = [0, 4], sizes = [16, 4], strides = [1, 1]} : vector<16x40xf32> to vector<16x4xf32>
      %44 = vector.extract_strided_slice %41 {offsets = [0, 8], sizes = [16, 32], strides = [1, 1]} : vector<16x40xf32> to vector<16x32xf32>
      %c0_25 = arith.constant 0 : index
      %c0_26 = arith.constant 0 : index
      %45 = vector.load %arg14[%c0_25, %c0_26] : memref<8x4xf32, #tpu.memory_space<vmem>>, vector<8x4xf32>
      %46 = arith.truncf %45 : vector<8x4xf32> to vector<8x4xbf16>
      %cst_27 = arith.constant dense<0.000000e+00> : vector<16x4xf32>
      %47 = tpu.matmul %3, %46, %cst_27 {dimension_numbers = #tpu.dot_dimension_numbers<[1], [0], [0], [1], [0, 0, 1, 1], [], []>} : vector<16x8xbf16>, vector<8x4xbf16>, vector<16x4xf32> -> vector<16x4xf32>
      %48 = arith.addf %42, %47 : vector<16x4xf32>
      %cst_28 = arith.constant 0.000000e+00 : f32
      %49 = vector.broadcast %cst_28 : f32 to vector<16x4xf32>
      %50 = arith.cmpf ogt, %48, %49 : vector<16x4xf32>
      %cst_29 = arith.constant 0.00999999977 : f32
      %51 = vector.broadcast %cst_29 : f32 to vector<16x4xf32>
      %52 = arith.mulf %51, %48 : vector<16x4xf32>
      %53 = arith.select %50, %48, %52 : vector<16x4xi1>, vector<16x4xf32>
      %54 = math.exp %53 : vector<16x4xf32>
      %cst_30 = arith.constant 0.000000e+00 : f32
      %55 = vector.broadcast %cst_30 : f32 to vector<16x4xf32>
      %56 = arith.cmpf oeq, %43, %55 : vector<16x4xf32>
      %cst_31 = arith.constant 1.000000e+00 : f32
      %57 = vector.broadcast %cst_31 : f32 to vector<16x4xf32>
      %58 = arith.select %56, %57, %43 : vector<16x4xi1>, vector<16x4xf32>
      %59 = tpu.reciprocal %58 {approx = true} : vector<16x4xf32> -> vector<16x4xf32>
      %60 = arith.mulf %54, %59 : vector<16x4xf32>
      %61 = vector.extract_strided_slice %44 {offsets = [0, 0], sizes = [16, 8], strides = [1, 1]} : vector<16x32xf32> to vector<16x8xf32>
      %62 = vector.extract_strided_slice %60 {offsets = [0, 0], sizes = [16, 1], strides = [1, 1]} : vector<16x4xf32> to vector<16x1xf32>
      %63 = vector.broadcast %62 : vector<16x1xf32> to vector<16x8xf32>
      %64 = arith.mulf %61, %63 : vector<16x8xf32>
      %65 = vector.extract_strided_slice %44 {offsets = [0, 8], sizes = [16, 8], strides = [1, 1]} : vector<16x32xf32> to vector<16x8xf32>
      %66 = vector.extract_strided_slice %60 {offsets = [0, 1], sizes = [16, 1], strides = [1, 1]} : vector<16x4xf32> to vector<16x1xf32>
      %67 = vector.broadcast %66 : vector<16x1xf32> to vector<16x8xf32>
      %68 = arith.mulf %65, %67 : vector<16x8xf32>
      %69 = vector.extract_strided_slice %44 {offsets = [0, 16], sizes = [16, 8], strides = [1, 1]} : vector<16x32xf32> to vector<16x8xf32>
      %70 = vector.extract_strided_slice %60 {offsets = [0, 2], sizes = [16, 1], strides = [1, 1]} : vector<16x4xf32> to vector<16x1xf32>
      %71 = vector.broadcast %70 : vector<16x1xf32> to vector<16x8xf32>
      %72 = arith.mulf %69, %71 : vector<16x8xf32>
      %73 = vector.extract_strided_slice %44 {offsets = [0, 24], sizes = [16, 8], strides = [1, 1]} : vector<16x32xf32> to vector<16x8xf32>
      %74 = vector.extract_strided_slice %60 {offsets = [0, 3], sizes = [16, 1], strides = [1, 1]} : vector<16x4xf32> to vector<16x1xf32>
      %75 = vector.broadcast %74 : vector<16x1xf32> to vector<16x8xf32>
      %76 = arith.mulf %73, %75 : vector<16x8xf32>
      %77 = tpu.concatenate %64, %68, %72, %76 in 1 : vector<16x8xf32>, vector<16x8xf32>, vector<16x8xf32>, vector<16x8xf32> -> vector<16x32xf32>
      %c0_32 = arith.constant 0 : index
      %c0_33 = arith.constant 0 : index
      %78 = vector.load %arg16[%c0_32, %c0_33] : memref<8x32xf32, #tpu.memory_space<vmem>>, vector<8x32xf32>
      %79 = arith.truncf %77 : vector<16x32xf32> to vector<16x32xbf16>
      %cst_34 = arith.constant dense<0.000000e+00> : vector<8x32xf32>
      %80 = tpu.matmul %3, %79, %cst_34 {dimension_numbers = #tpu.dot_dimension_numbers<[0], [0], [1], [1], [0, 1, 1, 1], [], []>} : vector<16x8xbf16>, vector<16x32xbf16>, vector<8x32xf32> -> vector<8x32xf32>
      %81 = arith.addf %78, %80 : vector<8x32xf32>
      %c0_35 = arith.constant 0 : index
      %c0_36 = arith.constant 0 : index
      %82 = vector.load %arg16[%c0_35, %c0_36] : memref<8x32xf32, #tpu.memory_space<vmem>>, vector<8x32xf32>
      tpu.vector_store %arg16[%c0_35, %c0_36], %81 {strides = array<i32>} : memref<8x32xf32, #tpu.memory_space<vmem>>, vector<8x32xf32>,
    } else {
    }
    %c2_i32_10 = arith.constant 2 : i32
    %18 = arith.cmpi eq, %arg0, %c2_i32_10 : i32
    %19 = arith.andi %18, %0 : i1
    %20 = arith.extui %19 : i1 to i32
    %c0_i32_11 = arith.constant 0 : i32
    %21 = arith.cmpi ne, %20, %c0_i32_11 : i32
    scf.if %21 {
      %c0_19 = arith.constant 0 : index
      %c0_20 = arith.constant 0 : index
      %36 = vector.load %arg16[%c0_19, %c0_20] : memref<8x32xf32, #tpu.memory_space<vmem>>, vector<8x32xf32>
      %c0_21 = arith.constant 0 : index
      %c0_22 = arith.constant 0 : index
      %37 = vector.load %arg8[%c0_21, %c0_22] : memref<32x4xf32, #tpu.memory_space<vmem>>, vector<32x4xf32>
      %cst = arith.constant dense<0.000000e+00> : vector<8x4xf32>
      %38 = tpu.matmul %36, %37, %cst {dimension_numbers = #tpu.dot_dimension_numbers<[1], [0], [0], [1], [0, 0, 1, 1], [], []>} : vector<8x32xf32>, vector<32x4xf32>, vector<8x4xf32> -> vector<8x4xf32>
      %c0_23 = arith.constant 0 : index
      %c0_24 = arith.constant 0 : index
      %39 = vector.load %arg9[%c0_23, %c0_24] : memref<1x4xf32, #tpu.memory_space<vmem>>, vector<1x4xf32>
      %40 = vector.broadcast %39 : vector<1x4xf32> to vector<8x4xf32>
      %41 = arith.addf %38, %40 : vector<8x4xf32>
      %c0_25 = arith.constant 0 : index
      %c0_26 = arith.constant 0 : index
      %42 = vector.load %arg17[%c0_25, %c0_26] : memref<8x4xf32, #tpu.memory_space<vmem>>, vector<8x4xf32>
      tpu.vector_store %arg17[%c0_25, %c0_26], %41 {strides = array<i32>} : memref<8x4xf32, #tpu.memory_space<vmem>>, vector<8x4xf32>,
      %c0_27 = arith.constant 0 : index
      %c0_28 = arith.constant 0 : index
      %43 = vector.load %arg10[%c0_27, %c0_28] : memref<4x2xf32, #tpu.memory_space<vmem>>, vector<4x2xf32>
      %cst_29 = arith.constant dense<0.000000e+00> : vector<8x2xf32>
      %44 = tpu.matmul %41, %43, %cst_29 {dimension_numbers = #tpu.dot_dimension_numbers<[1], [0], [0], [1], [0, 0, 1, 1], [], []>} : vector<8x4xf32>, vector<4x2xf32>, vector<8x2xf32> -> vector<8x2xf32>
      %45 = vector.extract_strided_slice %44 {offsets = [0, 0], sizes = [8, 1], strides = [1, 1]} : vector<8x2xf32> to vector<8x1xf32>
      %c0_30 = arith.constant 0 : index
      %c0_31 = arith.constant 0 : index
      %46 = vector.load %arg18[%c0_30, %c0_31] : memref<8x1xf32, #tpu.memory_space<vmem>>, vector<8x1xf32>
      tpu.vector_store %arg18[%c0_30, %c0_31], %45 {strides = array<i32>} : memref<8x1xf32, #tpu.memory_space<vmem>>, vector<8x1xf32>,
      %47 = vector.extract_strided_slice %44 {offsets = [0, 1], sizes = [8, 1], strides = [1, 1]} : vector<8x2xf32> to vector<8x1xf32>
      %c0_32 = arith.constant 0 : index
      %c0_33 = arith.constant 0 : index
      %48 = vector.load %arg19[%c0_32, %c0_33] : memref<8x1xf32, #tpu.memory_space<vmem>>, vector<8x1xf32>
      tpu.vector_store %arg19[%c0_32, %c0_33], %47 {strides = array<i32>} : memref<8x1xf32, #tpu.memory_space<vmem>>, vector<8x1xf32>,
      %cst_34 = arith.constant 0.000000e+00 : f32
      %49 = vector.broadcast %cst_34 : f32 to vector<8x1xf32>
      %c0_35 = arith.constant 0 : index
      %c0_36 = arith.constant 0 : index
      %50 = vector.load %arg20[%c0_35, %c0_36] : memref<8x1xf32, #tpu.memory_space<vmem>>, vector<8x1xf32>
      tpu.vector_store %arg20[%c0_35, %c0_36], %49 {strides = array<i32>} : memref<8x1xf32, #tpu.memory_space<vmem>>, vector<8x1xf32>,
    } else {
    }
    %c2_i32_12 = arith.constant 2 : i32
    %22 = arith.cmpi eq, %arg0, %c2_i32_12 : i32
    %23 = arith.extui %22 : i1 to i32
    %c0_i32_13 = arith.constant 0 : i32
    %24 = arith.cmpi ne, %23, %c0_i32_13 : i32
    scf.if %24 {
      %c0_19 = arith.constant 0 : index
      %c0_20 = arith.constant 0 : index
      %36 = vector.load %arg18[%c0_19, %c0_20] : memref<8x1xf32, #tpu.memory_space<vmem>>, vector<8x1xf32>
      %37 = arith.truncf %36 : vector<8x1xf32> to vector<8x1xbf16>
      %cst = arith.constant dense<0.000000e+00> : vector<16x1xf32>
      %38 = tpu.matmul %2, %37, %cst {dimension_numbers = #tpu.dot_dimension_numbers<[1], [0], [0], [1], [0, 0, 1, 1], [], []>} : vector<16x8xbf16>, vector<8x1xbf16>, vector<16x1xf32> -> vector<16x1xf32>
      %c0_21 = arith.constant 0 : index
      %c0_22 = arith.constant 0 : index
      %39 = vector.load %arg19[%c0_21, %c0_22] : memref<8x1xf32, #tpu.memory_space<vmem>>, vector<8x1xf32>
      %40 = arith.truncf %39 : vector<8x1xf32> to vector<8x1xbf16>
      %cst_23 = arith.constant dense<0.000000e+00> : vector<16x1xf32>
      %41 = tpu.matmul %3, %40, %cst_23 {dimension_numbers = #tpu.dot_dimension_numbers<[1], [0], [0], [1], [0, 0, 1, 1], [], []>} : vector<16x8xbf16>, vector<8x1xbf16>, vector<16x1xf32> -> vector<16x1xf32>
      %42 = arith.addf %38, %41 : vector<16x1xf32>
      %cst_24 = arith.constant 0.000000e+00 : f32
      %43 = vector.broadcast %cst_24 : f32 to vector<16x1xf32>
      %44 = arith.cmpf ogt, %42, %43 : vector<16x1xf32>
      %cst_25 = arith.constant 0.00999999977 : f32
      %45 = vector.broadcast %cst_25 : f32 to vector<16x1xf32>
      %46 = arith.mulf %45, %42 : vector<16x1xf32>
      %47 = arith.select %44, %42, %46 : vector<16x1xi1>, vector<16x1xf32>
      %48 = math.exp %47 : vector<16x1xf32>
      %c0_26 = arith.constant 0 : index
      %c0_27 = arith.constant 0 : index
      %49 = vector.load %arg20[%c0_26, %c0_27] : memref<8x1xf32, #tpu.memory_space<vmem>>, vector<8x1xf32>
      %50 = arith.truncf %48 : vector<16x1xf32> to vector<16x1xbf16>
      %cst_28 = arith.constant dense<0.000000e+00> : vector<8x1xf32>
      %51 = tpu.matmul %2, %50, %cst_28 {dimension_numbers = #tpu.dot_dimension_numbers<[0], [0], [1], [1], [0, 1, 1, 1], [], []>} : vector<16x8xbf16>, vector<16x1xbf16>, vector<8x1xf32> -> vector<8x1xf32>
      %52 = arith.addf %49, %51 : vector<8x1xf32>
      %c0_29 = arith.constant 0 : index
      %c0_30 = arith.constant 0 : index
      %53 = vector.load %arg20[%c0_29, %c0_30] : memref<8x1xf32, #tpu.memory_space<vmem>>, vector<8x1xf32>
      tpu.vector_store %arg20[%c0_29, %c0_30], %52 {strides = array<i32>} : memref<8x1xf32, #tpu.memory_space<vmem>>, vector<8x1xf32>,
    } else {
    }
    %c3_i32 = arith.constant 3 : i32
    %25 = arith.cmpi eq, %arg0, %c3_i32 : i32
    %26 = arith.andi %25, %0 : i1
    %27 = arith.extui %26 : i1 to i32
    %c0_i32_14 = arith.constant 0 : i32
    %28 = arith.cmpi ne, %27, %c0_i32_14 : i32
    scf.if %28 {
      %cst = arith.constant 0.000000e+00 : f32
      %36 = vector.broadcast %cst : f32 to vector<8x4xf32>
      %c0_19 = arith.constant 0 : index
      %c0_20 = arith.constant 0 : index
      %37 = vector.load %arg21[%c0_19, %c0_20] : memref<8x4xf32, #tpu.memory_space<vmem>>, vector<8x4xf32>
      tpu.vector_store %arg21[%c0_19, %c0_20], %36 {strides = array<i32>} : memref<8x4xf32, #tpu.memory_space<vmem>>, vector<8x4xf32>,
    } else {
    }
    %c3_i32_15 = arith.constant 3 : i32
    %29 = arith.cmpi eq, %arg0, %c3_i32_15 : i32
    %30 = arith.extui %29 : i1 to i32
    %c0_i32_16 = arith.constant 0 : i32
    %31 = arith.cmpi ne, %30, %c0_i32_16 : i32
    scf.if %31 {
      %c0_19 = arith.constant 0 : index
      %c0_20 = arith.constant 0 : index
      %36 = vector.load %arg18[%c0_19, %c0_20] : memref<8x1xf32, #tpu.memory_space<vmem>>, vector<8x1xf32>
      %c0_21 = arith.constant 0 : index
      %c0_22 = arith.constant 0 : index
      %37 = vector.load %arg20[%c0_21, %c0_22] : memref<8x1xf32, #tpu.memory_space<vmem>>, vector<8x1xf32>
      %c0_23 = arith.constant 0 : index
      %c0_24 = arith.constant 0 : index
      %38 = vector.load %arg17[%c0_23, %c0_24] : memref<8x4xf32, #tpu.memory_space<vmem>>, vector<8x4xf32>
      %39 = tpu.concatenate %36, %37, %38 in 1 : vector<8x1xf32>, vector<8x1xf32>, vector<8x4xf32> -> vector<8x6xf32>
      %40 = arith.truncf %39 : vector<8x6xf32> to vector<8x6xbf16>
      %cst = arith.constant dense<0.000000e+00> : vector<16x6xf32>
      %41 = tpu.matmul %2, %40, %cst {dimension_numbers = #tpu.dot_dimension_numbers<[1], [0], [0], [1], [0, 0, 1, 1], [], []>} : vector<16x8xbf16>, vector<8x6xbf16>, vector<16x6xf32> -> vector<16x6xf32>
      %42 = vector.extract_strided_slice %41 {offsets = [0, 0], sizes = [16, 1], strides = [1, 1]} : vector<16x6xf32> to vector<16x1xf32>
      %43 = vector.extract_strided_slice %41 {offsets = [0, 1], sizes = [16, 1], strides = [1, 1]} : vector<16x6xf32> to vector<16x1xf32>
      %44 = vector.extract_strided_slice %41 {offsets = [0, 2], sizes = [16, 4], strides = [1, 1]} : vector<16x6xf32> to vector<16x4xf32>
      %c0_25 = arith.constant 0 : index
      %c0_26 = arith.constant 0 : index
      %45 = vector.load %arg19[%c0_25, %c0_26] : memref<8x1xf32, #tpu.memory_space<vmem>>, vector<8x1xf32>
      %46 = arith.truncf %45 : vector<8x1xf32> to vector<8x1xbf16>
      %cst_27 = arith.constant dense<0.000000e+00> : vector<16x1xf32>
      %47 = tpu.matmul %3, %46, %cst_27 {dimension_numbers = #tpu.dot_dimension_numbers<[1], [0], [0], [1], [0, 0, 1, 1], [], []>} : vector<16x8xbf16>, vector<8x1xbf16>, vector<16x1xf32> -> vector<16x1xf32>
      %48 = arith.addf %42, %47 : vector<16x1xf32>
      %cst_28 = arith.constant 0.000000e+00 : f32
      %49 = vector.broadcast %cst_28 : f32 to vector<16x1xf32>
      %50 = arith.cmpf ogt, %48, %49 : vector<16x1xf32>
      %cst_29 = arith.constant 0.00999999977 : f32
      %51 = vector.broadcast %cst_29 : f32 to vector<16x1xf32>
      %52 = arith.mulf %51, %48 : vector<16x1xf32>
      %53 = arith.select %50, %48, %52 : vector<16x1xi1>, vector<16x1xf32>
      %54 = math.exp %53 : vector<16x1xf32>
      %cst_30 = arith.constant 0.000000e+00 : f32
      %55 = vector.broadcast %cst_30 : f32 to vector<16x1xf32>
      %56 = arith.cmpf oeq, %43, %55 : vector<16x1xf32>
      %cst_31 = arith.constant 1.000000e+00 : f32
      %57 = vector.broadcast %cst_31 : f32 to vector<16x1xf32>
      %58 = arith.select %56, %57, %43 : vector<16x1xi1>, vector<16x1xf32>
      %59 = tpu.reciprocal %58 {approx = true} : vector<16x1xf32> -> vector<16x1xf32>
      %60 = arith.mulf %54, %59 : vector<16x1xf32>
      %61 = vector.broadcast %60 : vector<16x1xf32> to vector<16x4xf32>
      %62 = arith.mulf %44, %61 : vector<16x4xf32>
      %c0_32 = arith.constant 0 : index
      %c0_33 = arith.constant 0 : index
      %63 = vector.load %arg21[%c0_32, %c0_33] : memref<8x4xf32, #tpu.memory_space<vmem>>, vector<8x4xf32>
      %64 = arith.truncf %62 : vector<16x4xf32> to vector<16x4xbf16>
      %cst_34 = arith.constant dense<0.000000e+00> : vector<8x4xf32>
      %65 = tpu.matmul %3, %64, %cst_34 {dimension_numbers = #tpu.dot_dimension_numbers<[0], [0], [1], [1], [0, 1, 1, 1], [], []>} : vector<16x8xbf16>, vector<16x4xbf16>, vector<8x4xf32> -> vector<8x4xf32>
      %66 = arith.addf %63, %65 : vector<8x4xf32>
      %c0_35 = arith.constant 0 : index
      %c0_36 = arith.constant 0 : index
      %67 = vector.load %arg21[%c0_35, %c0_36] : memref<8x4xf32, #tpu.memory_space<vmem>>, vector<8x4xf32>
      tpu.vector_store %arg21[%c0_35, %c0_36], %66 {strides = array<i32>} : memref<8x4xf32, #tpu.memory_space<vmem>>, vector<8x4xf32>,
    } else {
    }
    %c3_i32_17 = arith.constant 3 : i32
    %32 = arith.cmpi eq, %arg0, %c3_i32_17 : i32
    %33 = arith.andi %32, %1 : i1
    %34 = arith.extui %33 : i1 to i32
    %c0_i32_18 = arith.constant 0 : i32
    %35 = arith.cmpi ne, %34, %c0_i32_18 : i32
    scf.if %35 {
      %c0_19 = arith.constant 0 : index
      %c0_20 = arith.constant 0 : index
      %36 = vector.load %arg21[%c0_19, %c0_20] : memref<8x4xf32, #tpu.memory_space<vmem>>, vector<8x4xf32>
      %cst = arith.constant 0.000000e+00 : f32
      %37 = vector.broadcast %cst : f32 to vector<8x4xf32>
      %38 = arith.cmpf ogt, %36, %37 : vector<8x4xf32>
      %39 = math.exp %36 : vector<8x4xf32>
      %cst_21 = arith.constant 1.000000e+00 : f32
      %40 = vector.broadcast %cst_21 : f32 to vector<8x4xf32>
      %41 = arith.subf %39, %40 : vector<8x4xf32>
      %42 = arith.select %38, %36, %41 : vector<8x4xi1>, vector<8x4xf32>
      %cst_22 = arith.constant dense<0xFF800000> : vector<8xf32>
      %43 = vector.multi_reduction <maximumf>, %42, %cst_22 [1] : vector<8x4xf32> to vector<8xf32>
      %44 = vector.shape_cast %43 : vector<8xf32> to vector<8x1xf32>
      %45 = vector.broadcast %44 : vector<8x1xf32> to vector<8x4xf32>
      %46 = arith.subf %42, %45 : vector<8x4xf32>
      %47 = math.exp %46 : vector<8x4xf32>
      %cst_23 = arith.constant dense<0.000000e+00> : vector<8xf32>
      %48 = vector.multi_reduction <add>, %47, %cst_23 [1] : vector<8x4xf32> to vector<8xf32>
      %49 = vector.shape_cast %48 : vector<8xf32> to vector<8x1xf32>
      %50 = vector.broadcast %49 : vector<8x1xf32> to vector<8x4xf32>
      %51 = arith.divf %47, %50 : vector<8x4xf32>
      %c0_24 = arith.constant 0 : index
      %c0_25 = arith.constant 0 : index
      %52 = vector.load %arg11[%c0_24, %c0_25] : memref<8x4xf32, #tpu.memory_space<vmem>>, vector<8x4xf32>
      tpu.vector_store %arg11[%c0_24, %c0_25], %51 {strides = array<i32>} : memref<8x4xf32, #tpu.memory_space<vmem>>, vector<8x4xf32>,
    } else {
    }
    return
  }
  func.func @transform_0(%arg0: i32, %arg1: i32) -> (i32, i32) {
    %c0_i32 = arith.constant 0 : i32
    %c0_i32_0 = arith.constant 0 : i32
    %c0_i32_1 = arith.constant 0 : i32
    return %c0_i32, %c0_i32_0 : i32, i32
  }
  func.func @transform_1(%arg0: i32, %arg1: i32) -> (i32, i32) {
    %c0_i32 = arith.constant 0 : i32
    %c0_i32_0 = arith.constant 0 : i32
    return %arg1, %c0_i32 : i32, i32
  }
  func.func @transform_2(%arg0: i32, %arg1: i32) -> (i32, i32) {
    %c0_i32 = arith.constant 0 : i32
    %c0_i32_0 = arith.constant 0 : i32
    return %arg1, %c0_i32 : i32, i32
  }
  func.func @transform_3(%arg0: i32, %arg1: i32) -> (i32, i32) {
    %c0_i32 = arith.constant 0 : i32
    %c0_i32_0 = arith.constant 0 : i32
    %c0_i32_1 = arith.constant 0 : i32
    return %c0_i32, %c0_i32_0 : i32, i32
  }
  func.func @transform_4(%arg0: i32, %arg1: i32) -> (i32, i32) {
    %c0_i32 = arith.constant 0 : i32
    %c0_i32_0 = arith.constant 0 : i32
    %c0_i32_1 = arith.constant 0 : i32
    return %c0_i32, %c0_i32_0 : i32, i32
  }
  func.func @transform_5(%arg0: i32, %arg1: i32) -> (i32, i32) {
    %c0_i32 = arith.constant 0 : i32
    %c0_i32_0 = arith.constant 0 : i32
    %c0_i32_1 = arith.constant 0 : i32
    return %c0_i32, %c0_i32_0 : i32, i32
  }
  func.func @transform_6(%arg0: i32, %arg1: i32) -> (i32, i32) {
    %c0_i32 = arith.constant 0 : i32
    %c0_i32_0 = arith.constant 0 : i32
    %c0_i32_1 = arith.constant 0 : i32
    return %c0_i32, %c0_i32_0 : i32, i32
  }
  func.func @transform_7(%arg0: i32, %arg1: i32) -> (i32, i32) {
    %c0_i32 = arith.constant 0 : i32
    %c0_i32_0 = arith.constant 0 : i32
    %c0_i32_1 = arith.constant 0 : i32
    return %c0_i32, %c0_i32_0 : i32, i32
  }
  func.func @transform_8(%arg0: i32, %arg1: i32) -> (i32, i32) {
    %c0_i32 = arith.constant 0 : i32
    %c0_i32_0 = arith.constant 0 : i32
    %c0_i32_1 = arith.constant 0 : i32
    return %c0_i32, %c0_i32_0 : i32, i32
  }
  func.func @transform_9(%arg0: i32, %arg1: i32) -> (i32, i32) {
    %c0_i32 = arith.constant 0 : i32
    %c0_i32_0 = arith.constant 0 : i32
    %c0_i32_1 = arith.constant 0 : i32
    return %c0_i32, %c0_i32_0 : i32, i32
  }
}

</mosaic_0001>

<llo_original>
// kernel: tpu_custom_call.1
$region0: #{tpu_custom_call.1}
  #allocation0 [shape = 'u32[]', space=smem, size = 0x4, offset = 0x4, fixed_abs, tag = 'smem constant byte address 0x4 - core index']
  #allocation1 [shape = 'u32[72,128]{1,0:T(1,128)}', space=vmem, size = 0x9000, scoped, tag = 'internal scratch']
  #allocation2 [shape = 'f32[8,32]{1,0:T(8,128)}', space=vmem, size = 0x1000, scoped, tag = 'scratch operand']
  #allocation3 [shape = 'f32[8,4]{1,0:T(8,128)}', space=vmem, size = 0x1000, scoped, tag = 'scratch operand']
  #allocation4 [shape = 'f32[8,4]{1,0:T(8,128)}', space=vmem, size = 0x1000, scoped, tag = 'scratch operand']
  #allocation5 [shape = 'f32[8,4]{1,0:T(8,128)}', space=vmem, size = 0x1000, scoped, tag = 'scratch operand']
  #allocation6 [shape = 'f32[8,32]{1,0:T(8,128)}', space=vmem, size = 0x1000, scoped, tag = 'scratch operand']
  #allocation7 [shape = 'f32[8,4]{1,0:T(8,128)}', space=vmem, size = 0x1000, scoped, tag = 'scratch operand']
  #allocation8 [shape = 'f32[8,1]{1,0:T(8,128)}', space=vmem, size = 0x1000, scoped, tag = 'scratch operand']
  #allocation9 [shape = 'f32[8,1]{1,0:T(8,128)}', space=vmem, size = 0x1000, scoped, tag = 'scratch operand']
  #allocation10 [shape = 'f32[8,1]{1,0:T(8,128)}', space=vmem, size = 0x1000, scoped, tag = 'scratch operand']
  #allocation11 [shape = 'f32[8,4]{1,0:T(8,128)}', space=vmem, size = 0x1000, scoped, tag = 'scratch operand']
  %s0 = inlined_call_operand.vmem [shape: f32[8,16], index: 0, kind: input, shape index: {}]
  %s1 = inlined_call_operand.vmem [shape: bf16[48,8], index: 1, kind: input, shape index: {}]
  %s2 = inlined_call_operand.vmem [shape: bf16[48,8], index: 2, kind: input, shape index: {}]
  %s3 = inlined_call_operand.vmem [shape: f32[16,32], index: 3, kind: input, shape index: {}]
  %s4 = inlined_call_operand.vmem [shape: f32[1,32], index: 4, kind: input, shape index: {}]
  %s5 = inlined_call_operand.vmem [shape: f32[32,8], index: 5, kind: input, shape index: {}]
  %s6 = inlined_call_operand.vmem [shape: f32[32,4], index: 6, kind: input, shape index: {}]
  %s7 = inlined_call_operand.vmem [shape: f32[1,4], index: 7, kind: input, shape index: {}]
  %s8 = inlined_call_operand.vmem [shape: f32[4,2], index: 8, kind: input, shape index: {}]
  %s9 = inlined_call_operand.vmem [shape: f32[8,4], index: 9, kind: output, shape index: {}]
  %s10 = sld [smem:[#allocation0]]
  $region105: #{tpu_custom_call.1} parent=0
    _
  %s12 = ssub.s32 1, %s10
  %s13 = scalar_select 0, %s12, %s10
  loop: start=0, step=1, limit=14
  $region2: #{tpu_custom_call.1} parent=0 // loop_pre_header
    _
  $region3: #{tpu_custom_call.1} parent=0 // loop_header
    %s15 = sphi 0, %s19
    %p16 = scmp.ge.s32.totalorder %s15, 14
    %s22 = sphi 0, %s34
    %s23 = sphi 0, %s30
    %s24 = sphi 0, %s22
    %s25 = sphi 0, %s23
    %s26 = sphi 0, %s24
    %s27 = sphi 0, %s25
    %s35 = sphi 0, %s35
    %s37 = sphi 0, %s35
    %s38 = sphi 0, %s37
    %s52 = sphi 0, %s38
    %s58 = sphi 0, %s60
    %s61 = sphi 0, %s58
    %s62 = sphi 0, %s61
    %s78 = sphi 0, %s62
    %s84 = sphi 0, %s86
    %s87 = sphi 0, %s84
    %s88 = sphi 0, %s87
    %s104 = sphi 0, %s88
    %s108 = sphi 0, %s108
    %s110 = sphi 0, %s108
    %s111 = sphi 0, %s110
    %s125 = sphi 0, %s111
    %s129 = sphi 0, %s129
    %s131 = sphi 0, %s129
    %s132 = sphi 0, %s131
    %s146 = sphi 0, %s132
    %s150 = sphi 0, %s150
    %s152 = sphi 0, %s150
    %s153 = sphi 0, %s152
    %s167 = sphi 0, %s153
    %s171 = sphi 0, %s171
    %s173 = sphi 0, %s171
    %s174 = sphi 0, %s173
    %s188 = sphi 0, %s174
    %s192 = sphi 0, %s192
    %s194 = sphi 0, %s192
    %s195 = sphi 0, %s194
    %s209 = sphi 0, %s195
    %s213 = sphi 0, %s213
    %s215 = sphi 0, %s213
    %s216 = sphi 0, %s215
    %s230 = sphi 0, %s216
    %s234 = sphi 0, %s234
    %s236 = sphi 0, %s234
    %s237 = sphi 0, %s236
    %s251 = sphi 0, %s237
  $region4: #{tpu_custom_call.1} parent=0 // loop_header_branch
    %18 = sbr.rel (%p16) target = $region8
  $region5: #{tpu_custom_call.1} parent=0 // loop_body
    %s20 = ssub.s32 %s15, 1
    %s21 = ssub.s32 %s15, 2
    %s28 = sadd.s32 1, %s23
    %p29 = scmp.ge.s32.totalorder %s28, 3
    %s30 = scalar_select %p29, 0, %s28
    %s31 = sadd.s32 1, %s22
    %s32 = scalar_select %p29, %s31, %s22
    %p33 = scmp.ge.s32.totalorder %s32, 4
    %s34 = scalar_select %p33, 0, %s32
    %s36 = sadd.s32 %s35, 1
    %p39 = scmp.eq.s32.totalorder %s15, 11
    %p40 = scmp.ne.s32.totalorder %s35, %s37
    %p41 = scmp.eq.s32.totalorder %s15, 0
    %p42 = por %p40, %p41
    %p43 = scmp.ne.s32.totalorder %s35, %s37
    %p44 = scmp.eq.s32.totalorder %s20, 11
    %p45 = por %p43, %p44
    %p46 = scmp.ne.s32.totalorder %s37, %s38
    %p47 = scmp.eq.s32.totalorder %s20, 0
    %p48 = por %p46, %p47
    %p49 = scmp.ne.s32.totalorder %s37, %s38
    %p50 = scmp.eq.s32.totalorder %s21, 11
    %p51 = por %p49, %p50
    %p53 = scmp.ne.s32.totalorder %s38, %s52
    %p54 = scmp.eq.s32.totalorder %s21, 0
    %p55 = por %p53, %p54
    %s56 = ssub.s32 %s23, %s30
    %p57 = scmp.eq.s32.totalorder %s56, 0
    %s59 = sadd.s32 %s58, 1
    %s60 = scalar_select %p57, %s58, %s59
    %p63 = pneg %p57
    %p64 = scmp.eq.s32.totalorder %s15, 11
    %p65 = por %p63, %p64
    %p66 = scmp.ne.s32.totalorder %s58, %s61
    %p67 = scmp.eq.s32.totalorder %s15, 0
    %p68 = por %p66, %p67
    %p69 = scmp.ne.s32.totalorder %s58, %s61
    %p70 = scmp.eq.s32.totalorder %s20, 11
    %p71 = por %p69, %p70
    %p72 = scmp.ne.s32.totalorder %s61, %s62
    %p73 = scmp.eq.s32.totalorder %s20, 0
    %p74 = por %p72, %p73
    %p75 = scmp.ne.s32.totalorder %s61, %s62
    %p76 = scmp.eq.s32.totalorder %s21, 11
    %p77 = por %p75, %p76
    %p79 = scmp.ne.s32.totalorder %s62, %s78
    %p80 = scmp.eq.s32.totalorder %s21, 0
    %p81 = por %p79, %p80
    %s82 = ssub.s32 %s23, %s30
    %p83 = scmp.eq.s32.totalorder %s82, 0
    %s85 = sadd.s32 %s84, 1
    %s86 = scalar_select %p83, %s84, %s85
    %p89 = pneg %p83
    %p90 = scmp.eq.s32.totalorder %s15, 11
    %p91 = por %p89, %p90
    %p92 = scmp.ne.s32.totalorder %s84, %s87
    %p93 = scmp.eq.s32.totalorder %s15, 0
    %p94 = por %p92, %p93
    %p95 = scmp.ne.s32.totalorder %s84, %s87
    %p96 = scmp.eq.s32.totalorder %s20, 11
    %p97 = por %p95, %p96
    %p98 = scmp.ne.s32.totalorder %s87, %s88
    %p99 = scmp.eq.s32.totalorder %s20, 0
    %p100 = por %p98, %p99
    %p101 = scmp.ne.s32.totalorder %s87, %s88
    %p102 = scmp.eq.s32.totalorder %s21, 11
    %p103 = por %p101, %p102
    %p105 = scmp.ne.s32.totalorder %s88, %s104
    %p106 = scmp.eq.s32.totalorder %s21, 0
    %p107 = por %p105, %p106
    %s109 = sadd.s32 %s108, 1
    %p112 = scmp.eq.s32.totalorder %s15, 11
    %p113 = scmp.ne.s32.totalorder %s108, %s110
    %p114 = scmp.eq.s32.totalorder %s15, 0
    %p115 = por %p113, %p114
    %p116 = scmp.ne.s32.totalorder %s108, %s110
    %p117 = scmp.eq.s32.totalorder %s20, 11
    %p118 = por %p116, %p117
    %p119 = scmp.ne.s32.totalorder %s110, %s111
    %p120 = scmp.eq.s32.totalorder %s20, 0
    %p121 = por %p119, %p120
    %p122 = scmp.ne.s32.totalorder %s110, %s111
    %p123 = scmp.eq.s32.totalorder %s21, 11
    %p124 = por %p122, %p123
    %p126 = scmp.ne.s32.totalorder %s111, %s125
    %p127 = scmp.eq.s32.totalorder %s21, 0
    %p128 = por %p126, %p127
    %s130 = sadd.s32 %s129, 1
    %p133 = scmp.eq.s32.totalorder %s15, 11
    %p134 = scmp.ne.s32.totalorder %s129, %s131
    %p135 = scmp.eq.s32.totalorder %s15, 0
    %p136 = por %p134, %p135
    %p137 = scmp.ne.s32.totalorder %s129, %s131
    %p138 = scmp.eq.s32.totalorder %s20, 11
    %p139 = por %p137, %p138
    %p140 = scmp.ne.s32.totalorder %s131, %s132
    %p141 = scmp.eq.s32.totalorder %s20, 0
    %p142 = por %p140, %p141
    %p143 = scmp.ne.s32.totalorder %s131, %s132
    %p144 = scmp.eq.s32.totalorder %s21, 11
    %p145 = por %p143, %p144
    %p147 = scmp.ne.s32.totalorder %s132, %s146
    %p148 = scmp.eq.s32.totalorder %s21, 0
    %p149 = por %p147, %p148
    %s151 = sadd.s32 %s150, 1
    %p154 = scmp.eq.s32.totalorder %s15, 11
    %p155 = scmp.ne.s32.totalorder %s150, %s152
    %p156 = scmp.eq.s32.totalorder %s15, 0
    %p157 = por %p155, %p156
    %p158 = scmp.ne.s32.totalorder %s150, %s152
    %p159 = scmp.eq.s32.totalorder %s20, 11
    %p160 = por %p158, %p159
    %p161 = scmp.ne.s32.totalorder %s152, %s153
    %p162 = scmp.eq.s32.totalorder %s20, 0
    %p163 = por %p161, %p162
    %p164 = scmp.ne.s32.totalorder %s152, %s153
    %p165 = scmp.eq.s32.totalorder %s21, 11
    %p166 = por %p164, %p165
    %p168 = scmp.ne.s32.totalorder %s153, %s167
    %p169 = scmp.eq.s32.totalorder %s21, 0
    %p170 = por %p168, %p169
    %s172 = sadd.s32 %s171, 1
    %p175 = scmp.eq.s32.totalorder %s15, 11
    %p176 = scmp.ne.s32.totalorder %s171, %s173
    %p177 = scmp.eq.s32.totalorder %s15, 0
    %p178 = por %p176, %p177
    %p179 = scmp.ne.s32.totalorder %s171, %s173
    %p180 = scmp.eq.s32.totalorder %s20, 11
    %p181 = por %p179, %p180
    %p182 = scmp.ne.s32.totalorder %s173, %s174
    %p183 = scmp.eq.s32.totalorder %s20, 0
    %p184 = por %p182, %p183
    %p185 = scmp.ne.s32.totalorder %s173, %s174
    %p186 = scmp.eq.s32.totalorder %s21, 11
    %p187 = por %p185, %p186
    %p189 = scmp.ne.s32.totalorder %s174, %s188
    %p190 = scmp.eq.s32.totalorder %s21, 0
    %p191 = por %p189, %p190
    %s193 = sadd.s32 %s192, 1
    %p196 = scmp.eq.s32.totalorder %s15, 11
    %p197 = scmp.ne.s32.totalorder %s192, %s194
    %p198 = scmp.eq.s32.totalorder %s15, 0
    %p199 = por %p197, %p198
    %p200 = scmp.ne.s32.totalorder %s192, %s194
    %p201 = scmp.eq.s32.totalorder %s20, 11
    %p202 = por %p200, %p201
    %p203 = scmp.ne.s32.totalorder %s194, %s195
    %p204 = scmp.eq.s32.totalorder %s20, 0
    %p205 = por %p203, %p204
    %p206 = scmp.ne.s32.totalorder %s194, %s195
    %p207 = scmp.eq.s32.totalorder %s21, 11
    %p208 = por %p206, %p207
    %p210 = scmp.ne.s32.totalorder %s195, %s209
    %p211 = scmp.eq.s32.totalorder %s21, 0
    %p212 = por %p210, %p211
    %s214 = sadd.s32 %s213, 1
    %p217 = scmp.eq.s32.totalorder %s15, 11
    %p218 = scmp.ne.s32.totalorder %s213, %s215
    %p219 = scmp.eq.s32.totalorder %s15, 0
    %p220 = por %p218, %p219
    %p221 = scmp.ne.s32.totalorder %s213, %s215
    %p222 = scmp.eq.s32.totalorder %s20, 11
    %p223 = por %p221, %p222
    %p224 = scmp.ne.s32.totalorder %s215, %s216
    %p225 = scmp.eq.s32.totalorder %s20, 0
    %p226 = por %p224, %p225
    %p227 = scmp.ne.s32.totalorder %s215, %s216
    %p228 = scmp.eq.s32.totalorder %s21, 11
    %p229 = por %p227, %p228
    %p231 = scmp.ne.s32.totalorder %s216, %s230
    %p232 = scmp.eq.s32.totalorder %s21, 0
    %p233 = por %p231, %p232
    %s235 = sadd.s32 %s234, 1
    %p238 = scmp.eq.s32.totalorder %s15, 11
    %p239 = scmp.ne.s32.totalorder %s234, %s236
    %p240 = scmp.eq.s32.totalorder %s15, 0
    %p241 = por %p239, %p240
    %p242 = scmp.ne.s32.totalorder %s234, %s236
    %p243 = scmp.eq.s32.totalorder %s20, 11
    %p244 = por %p242, %p243
    %p245 = scmp.ne.s32.totalorder %s236, %s237
    %p246 = scmp.eq.s32.totalorder %s20, 0
    %p247 = por %p245, %p246
    %p248 = scmp.ne.s32.totalorder %s236, %s237
    %p249 = scmp.eq.s32.totalorder %s21, 11
    %p250 = por %p248, %p249
    %p252 = scmp.ne.s32.totalorder %s237, %s251
    %p253 = scmp.eq.s32.totalorder %s21, 0
    %p254 = por %p252, %p253
    %p255 = scmp.le.s32.totalorder 1, %s15
    %p256 = scmp.lt.s32.totalorder %s15, 13
    %p257 = pnand %p255, %p256
    %p258 = pneg %p257
    // Predicated region
    $region9: #{tpu_custom_call.1} parent=5 // pred_check
      _
    $region10: #{tpu_custom_call.1} parent=5 // pred_check_branch
      %260 = sbr.rel (%p257) target = $region12
    $region11: #{tpu_custom_call.1} parent=5 // pred_region
      %s261 = ssub.s32 %s15, 1
      // Predicated region
      $region13: #{tpu_custom_call.1} parent=11 // pred_check
        %p262 = pneg %p48
      $region14: #{tpu_custom_call.1} parent=11 // pred_check_branch
        %264 = sbr.rel (%p262) target = $region16
      $region15: #{tpu_custom_call.1} parent=11 // pred_region
        _
      $region16: #{tpu_custom_call.1} parent=11 // pred_fallthru
        _
      // Predicated region
      $region17: #{tpu_custom_call.1} parent=11 // pred_check
        %p265 = pneg %p121
      $region18: #{tpu_custom_call.1} parent=11 // pred_check_branch
        %267 = sbr.rel (%p265) target = $region20
      $region19: #{tpu_custom_call.1} parent=11 // pred_region
        _
      $region20: #{tpu_custom_call.1} parent=11 // pred_fallthru
        _
      // Predicated region
      $region21: #{tpu_custom_call.1} parent=11 // pred_check
        %p268 = pneg %p142
      $region22: #{tpu_custom_call.1} parent=11 // pred_check_branch
        %270 = sbr.rel (%p268) target = $region24
      $region23: #{tpu_custom_call.1} parent=11 // pred_region
        _
      $region24: #{tpu_custom_call.1} parent=11 // pred_fallthru
        _
      // Predicated region
      $region25: #{tpu_custom_call.1} parent=11 // pred_check
        %p271 = pneg %p163
      $region26: #{tpu_custom_call.1} parent=11 // pred_check_branch
        %273 = sbr.rel (%p271) target = $region28
      $region27: #{tpu_custom_call.1} parent=11 // pred_region
        _
      $region28: #{tpu_custom_call.1} parent=11 // pred_fallthru
        _
      // Predicated region
      $region29: #{tpu_custom_call.1} parent=11 // pred_check
        %p274 = pneg %p184
      $region30: #{tpu_custom_call.1} parent=11 // pred_check_branch
        %276 = sbr.rel (%p274) target = $region32
      $region31: #{tpu_custom_call.1} parent=11 // pred_region
        _
      $region32: #{tpu_custom_call.1} parent=11 // pred_fallthru
        _
      // Predicated region
      $region33: #{tpu_custom_call.1} parent=11 // pred_check
        %p277 = pneg %p205
      $region34: #{tpu_custom_call.1} parent=11 // pred_check_branch
        %279 = sbr.rel (%p277) target = $region36
      $region35: #{tpu_custom_call.1} parent=11 // pred_region
        _
      $region36: #{tpu_custom_call.1} parent=11 // pred_fallthru
        _
      // Predicated region
      $region37: #{tpu_custom_call.1} parent=11 // pred_check
        %p280 = pneg %p226
      $region38: #{tpu_custom_call.1} parent=11 // pred_check_branch
        %282 = sbr.rel (%p280) target = $region40
      $region39: #{tpu_custom_call.1} parent=11 // pred_region
        _
      $region40: #{tpu_custom_call.1} parent=11 // pred_fallthru
        _
    $region12: #{tpu_custom_call.1} parent=5 // pred_fallthru
      _
    %p283 = scmp.lt.s32.totalorder %s15, 12
    // Predicated region
    $region41: #{tpu_custom_call.1} parent=5 // pred_check
      %p284 = pneg %p283
    $region42: #{tpu_custom_call.1} parent=5 // pred_check_branch
      %286 = sbr.rel (%p284) target = $region44
    $region43: #{tpu_custom_call.1} parent=5 // pred_region
      // Predicated region
      $region45: #{tpu_custom_call.1} parent=43 // pred_check
        %p287 = pneg %p68
      $region46: #{tpu_custom_call.1} parent=43 // pred_check_branch
        %289 = sbr.rel (%p287) target = $region48
      $region47: #{tpu_custom_call.1} parent=43 // pred_region
        %s290 = smul.u32 2, %s23
        %p291 = scmp.lt.s32.totalorder %s290, 5
        %s292 = scalar_select %p291, %s290, 5
        %s293 = smul.addr %s292, 4
        %s294 = scalar_lea.vmem %s1, %s293
        %s295 = smul.u32 2, %s23
      $region48: #{tpu_custom_call.1} parent=43 // pred_fallthru
        _
      // Predicated region
      $region49: #{tpu_custom_call.1} parent=43 // pred_check
        %p296 = pneg %p94
      $region50: #{tpu_custom_call.1} parent=43 // pred_check_branch
        %298 = sbr.rel (%p296) target = $region52
      $region51: #{tpu_custom_call.1} parent=43 // pred_region
        %s299 = smul.u32 2, %s23
        %p300 = scmp.lt.s32.totalorder %s299, 5
        %s301 = scalar_select %p300, %s299, 5
        %s302 = smul.addr %s301, 4
        %s303 = scalar_lea.vmem %s2, %s302
        %s304 = smul.u32 2, %s23
      $region52: #{tpu_custom_call.1} parent=43 // pred_fallthru
        _
    $region44: #{tpu_custom_call.1} parent=5 // pred_fallthru
      _
    %p305 = scmp.le.s32.totalorder 1, %s15
    %p306 = scmp.lt.s32.totalorder %s15, 13
    %p307 = pnand %p305, %p306
    %p308 = pneg %p307
    // Predicated region
    $region53: #{tpu_custom_call.1} parent=5 // pred_check
      _
    $region54: #{tpu_custom_call.1} parent=5 // pred_check_branch
      %310 = sbr.rel (%p307) target = $region56
    $region55: #{tpu_custom_call.1} parent=5 // pred_region
      %s311 = ssub.s32 %s15, 1
      %p312 = pneg %p48
      %p313 = pneg %p45
      %s314 = smul.u32 2, %s25
      %p315 = scmp.lt.s32.totalorder %s314, 5
      %s316 = scalar_select %p315, %s314, 5
      %s317 = smul.addr %s316, 4
      %s318 = scalar_lea.vmem %s1, %s317
      %p319 = pneg %p74
      %p320 = pneg %p71
      %s321 = smul.u32 2, %s25
      %p322 = scmp.lt.s32.totalorder %s321, 5
      %s323 = scalar_select %p322, %s321, 5
      %s324 = smul.addr %s323, 4
      %s325 = scalar_lea.vmem %s2, %s324
      %p326 = pneg %p100
      %p327 = pneg %p97
      %p328 = pneg %p121
      %p329 = pneg %p118
      %p330 = pneg %p142
      %p331 = pneg %p139
      %p332 = pneg %p163
      %p333 = pneg %p160
      %p334 = pneg %p184
      %p335 = pneg %p181
      %p336 = pneg %p205
      %p337 = pneg %p202
      %p338 = pneg %p226
      %p339 = pneg %p223
      %p340 = pneg %p247
      %p341 = pneg %p244
      %s342 = smul.u32 2, %s25
      %p343 = scmp.lt.s32.totalorder %s342, 5
      %s344 = scalar_select %p343, %s342, 5
      %s345 = smul.addr %s344, 4
      %s346 = scalar_lea.vmem %s1, %s345
      %s347 = smul.u32 2, %s25
      %s348 = smul.u32 2, %s25
      %p349 = scmp.lt.s32.totalorder %s348, 5
      %s350 = scalar_select %p349, %s348, 5
      %s351 = smul.addr %s350, 4
      %s352 = scalar_lea.vmem %s2, %s351
      %s353 = smul.u32 2, %s25
      %p355 = scmp.eq.s32.totalorder %s25, 0
      %p356 = scmp.eq.s32.totalorder %s25, 2
      %v357 = vld [vmem:[%s346] sm:$0xf]
      %v358 = vld [vmem:[%s346 + $0x4] sm:$0xf]
      %v359 = vld [vmem:[%s352] sm:$0xf]
      %v360 = vld [vmem:[%s352 + $0x4] sm:$0xf]
      %p361 = scmp.eq.s32.totalorder %s24, 0
      %p362 = pnand %p361, %p355
      %p363 = pneg %p362
      // Predicated region
      $region57: #{tpu_custom_call.1} parent=55 // pred_check
        _
      $region58: #{tpu_custom_call.1} parent=55 // pred_check_branch
        %365 = sbr.rel (%p362) target = $region60
      $region59: #{tpu_custom_call.1} parent=55 // pred_region
        %v366 = vld [vmem:[%s0] sm:$0xff]
        %v367 = vld [vmem:[%s3] sm:$0xff]
        %v368 = vld [vmem:[%s3 + $0x8] sm:$0xff]
        %v369 = vld [vmem:[%s4] sm:$0x1]
        %v371 = vperm.slane %v369, 0
        %vm373 = vcmask 130048
        %v375 = vsel %vm373, %v366, 0
        %377 = vmatpush.msra.mxu0 0.0
        %378 = vmatpush.msra.mxu0 0.0
        %379 = vmatpush.msra.mxu0 0.0
        %380 = vmatpush.msra.mxu0 0.0
        %381 = vmatpush.msra.mxu0 0.0
        %382 = vmatpush.msra.mxu0 0.0
        %383 = vmatpush.msra.mxu0 0.0
        %384 = vmatpush.msra.mxu0 0.0
        %385 = vmatpush.msra.mxu0 0.0
        %386 = vmatpush.msra.mxu0 0.0
        %387 = vmatpush.msra.mxu0 0.0
        %388 = vmatpush.msra.mxu0 0.0
        %389 = vmatpush.msra.mxu0 0.0
        %390 = vmatpush.msra.mxu0 0.0
        %391 = vmatpush.msra.mxu0 %v368
        %392 = vmatpush.msra.mxu0 %v367
        %393 = vmatmul.f32.gmra.mxu0 %v375
        %v394 = vpop.f32.mrf.mxu0
        %v395 = vadd.f32 %v371, %v394
        %396 = vdwg.mxu0
        %vm397 = vcmask 261120
        %398 = vst.msk [vmem:[#allocation2] sm:$0xff] %vm397, %v395
        %v399 = vld [vmem:[%s5] sm:$0xff]
        %v400 = vld [vmem:[%s5 + $0x8] sm:$0xff]
        %v401 = vld [vmem:[%s5 + $0x10] sm:$0xff]
        %v402 = vld [vmem:[%s5 + $0x18] sm:$0xff]
        %v404 = vsel %vm397, %v395, 0
        %406 = vmatpush.msra.mxu0 0.0
        %407 = vmatpush.msra.mxu0 0.0
        %408 = vmatpush.msra.mxu0 0.0
        %409 = vmatpush.msra.mxu0 0.0
        %410 = vmatpush.msra.mxu0 0.0
        %411 = vmatpush.msra.mxu0 0.0
        %412 = vmatpush.msra.mxu0 0.0
        %413 = vmatpush.msra.mxu0 0.0
        %414 = vmatpush.msra.mxu0 0.0
        %415 = vmatpush.msra.mxu0 0.0
        %416 = vmatpush.msra.mxu0 0.0
        %417 = vmatpush.msra.mxu0 0.0
        %418 = vmatpush.msra.mxu0 %v402
        %419 = vmatpush.msra.mxu0 %v401
        %420 = vmatpush.msra.mxu0 %v400
        %421 = vmatpush.msra.mxu0 %v399
        %422 = vmatmul.f32.gmra.mxu0 %v404
        %v423 = vpop.f32.mrf.mxu0
        %v424 = vadd.f32 0.0, %v423
        %425 = vdwg.mxu0
        %vm426 = vcmask 31744
        %427 = vst.msk [vmem:[#allocation3] sm:$0xff] %vm426, %v424
        %429 = vrot.lane.b32.xlu0 %v424, 124
        %v430 = vpop.permute.xlu0 %429
        %432 = vst.msk [vmem:[#allocation4] sm:$0xff] %vm426, %v430
        %433 = vst.msk [vmem:[#allocation5] sm:$0xff] %vm426, 0.0
      $region60: #{tpu_custom_call.1} parent=55 // pred_fallthru
        _
      // Predicated region
      $region61: #{tpu_custom_call.1} parent=55 // pred_check
        %p434 = pneg %p361
      $region62: #{tpu_custom_call.1} parent=55 // pred_check_branch
        %436 = sbr.rel (%p434) target = $region64
      $region63: #{tpu_custom_call.1} parent=55 // pred_region
        %v437 = vld [vmem:[#allocation3] sm:$0xff]
        %v438 = vpack.c.bf16 %v437, %v437
        %v439 = vld [vmem:[#allocation4] sm:$0xff]
        %v440 = vpack.c.bf16 %v439, %v439
        %v443 = vunpack.c.l.b16 %v359
        %v444 = vunpack.c.l.b16 %v360
        %v445 = vpack.c.b16 %v444, %v443
        %vm446 = vcmask 64512
        %v448 = vsel %vm446, %v445, 0
        %vm450 = vcmask 1043456
        %v452 = vsel %vm450, %v440, 0
        %454 = vmatpush.bf16.msra.mxu0 0
        %455 = vmatpush.bf16.msra.mxu0 0
        %456 = vmatpush.bf16.msra.mxu0 0
        %457 = vmatpush.bf16.msra.mxu0 0
        %458 = vmatpush.bf16.msra.mxu0 0
        %459 = vmatpush.bf16.msra.mxu0 0
        %460 = vmatpush.bf16.msra.mxu0 0
        %461 = vmatpush.bf16.msra.mxu0 %v452
        %462 = vmatmul.bf16.gmra.mxu0 %v448
        %v463 = vpop.f32.mrf.mxu0
        %v464 = vadd.f32 0.0, %v463
        %v465 = vpop.f32.mrf.mxu0
        %v466 = vadd.f32 0.0, %v465
        %467 = vdwg.mxu0
        %v470 = vunpack.c.l.b16 %v357
        %v471 = vunpack.c.l.b16 %v358
        %v472 = vpack.c.b16 %v471, %v470
        %v474 = vsel %vm446, %v472, 0
        %v477 = vsel %vm450, %v438, 0
        %479 = vmatpush.bf16.msra.mxu0 0
        %480 = vmatpush.bf16.msra.mxu0 0
        %481 = vmatpush.bf16.msra.mxu0 0
        %482 = vmatpush.bf16.msra.mxu0 0
        %483 = vmatpush.bf16.msra.mxu0 0
        %484 = vmatpush.bf16.msra.mxu0 0
        %485 = vmatpush.bf16.msra.mxu0 0
        %486 = vmatpush.bf16.msra.mxu0 %v477
        %487 = vmatmul.bf16.gmra.mxu0 %v474
        %v488 = vpop.f32.mrf.mxu0
        %v489 = vadd.f32 %v464, %v488
        %v490 = vpop.f32.mrf.mxu0
        %v491 = vadd.f32 %v466, %v490
        %492 = vdwg.mxu0
        %vm493 = vcmp.gt.f32.partialorder %v489, 0.0
        %vm494 = vcmp.gt.f32.partialorder %v491, 0.0
        %v495 = vmul.f32 %v489, 0.01
        %v496 = vmul.f32 %v491, 0.01
        %v497 = vsel %vm493, %v489, %v495
        %v498 = vsel %vm494, %v491, %v496
        %v499 = vmul.f32 %v497, 1.442695
        %v500 = vpow.pop %v499
        %v501 = vmul.f32 %v498, 1.442695
        %v502 = vpow.pop %v501
        %v503 = vld [vmem:[#allocation5] sm:$0xff]
        %v504 = vpack.c.bf16 %v502, %v500
        %506 = vxpose.xlu0.c.b16.start [1/8] %v472, 128
        %507 = vxpose.xlu0.c.b16.cont [2/8] 0, 128
        %508 = vxpose.xlu0.c.b16.cont [3/8] 0, 128
        %509 = vxpose.xlu0.c.b16.cont [4/8] 0, 128
        %510 = vxpose.xlu0.c.b16.cont [5/8] 0, 128
        %511 = vxpose.xlu0.c.b16.cont [6/8] 0, 128
        %512 = vxpose.xlu0.c.b16.cont [7/8] 0, 128
        %513 = vxpose.xlu0.c.b16.end [8/8] 0, 128
        %v514 = vpop.trf.xlu0
        %v515 = vpop.trf.xlu0
        %v516 = vpop.trf.xlu0
        %v517 = vpop.trf.xlu0
        %v518 = vpop.trf.xlu0
        %v519 = vpop.trf.xlu0
        %v520 = vpop.trf.xlu0
        %v521 = vpop.trf.xlu0
        %vm522 = vcmask 130048
        %v524 = vsel %vm522, %v514, 0
        %526 = vmatpush.bf16.msra.mxu0 0
        %527 = vmatpush.bf16.msra.mxu0 0
        %528 = vmatpush.bf16.msra.mxu0 0
        %529 = vmatpush.bf16.msra.mxu0 0
        %530 = vmatpush.bf16.msra.mxu0 0
        %531 = vmatpush.bf16.msra.mxu0 0
        %532 = vmatpush.bf16.msra.mxu0 0
        %533 = vmatpush.bf16.msra.mxu0 %v504
        %534 = vmatmul.bf16.gmra.mxu0 %v524
        %v535 = vpop.f32.mrf.mxu0
        %v536 = vadd.f32 0.0, %v535
        %v537 = vpop.f32.mrf.mxu0
        %538 = vdwg.mxu0
        %v539 = vadd.f32 %v503, %v536
        %vm540 = vcmask 31744
        %541 = vst.msk [vmem:[#allocation5] sm:$0xff] %vm540, %v539
      $region64: #{tpu_custom_call.1} parent=55 // pred_fallthru
        _
      %p542 = scmp.eq.s32.totalorder %s24, 1
      %p543 = pnand %p542, %p355
      %p544 = pneg %p543
      // Predicated region
      $region65: #{tpu_custom_call.1} parent=55 // pred_check
        _
      $region66: #{tpu_custom_call.1} parent=55 // pred_check_branch
        %546 = sbr.rel (%p543) target = $region68
      $region67: #{tpu_custom_call.1} parent=55 // pred_region
        %vm547 = vcmask 261120
        %548 = vst.msk [vmem:[#allocation6] sm:$0xff] %vm547, 0.0
      $region68: #{tpu_custom_call.1} parent=55 // pred_fallthru
        _
      // Predicated region
      $region69: #{tpu_custom_call.1} parent=55 // pred_check
        %p549 = pneg %p542
      $region70: #{tpu_custom_call.1} parent=55 // pred_check_branch
        %551 = sbr.rel (%p549) target = $region72
      $region71: #{tpu_custom_call.1} parent=55 // pred_region
        %v552 = vld [vmem:[#allocation3] sm:$0xff]
        %v553 = vld [vmem:[#allocation5] sm:$0xff]
        %v554 = vld [vmem:[#allocation2] sm:$0xff]
        %556 = vrot.lane.b32.xlu0 %v553, 4
        %v557 = vpop.permute.xlu0 %556
        %560 = vrot.lane.b32.xlu0 %v554, 8
        %v561 = vpop.permute.xlu0 %560
        %vm563 = vcmask 31744
        %v564 = vsel %vm563, %v552, %v557
        %vm565 = vcmask 64512
        %v566 = vsel %vm565, %v564, %v561
        %v567 = vpack.c.bf16 %v566, %v566
        %v570 = vunpack.c.l.b16 %v357
        %v571 = vunpack.c.l.b16 %v358
        %v572 = vpack.c.b16 %v571, %v570
        %v574 = vsel %vm565, %v572, 0
        %vm576 = vcmask 1043456
        %v578 = vsel %vm576, %v567, 0
        %580 = vmatpush.bf16.msra.mxu0 0
        %581 = vmatpush.bf16.msra.mxu0 0
        %582 = vmatpush.bf16.msra.mxu0 0
        %583 = vmatpush.bf16.msra.mxu0 0
        %584 = vmatpush.bf16.msra.mxu0 0
        %585 = vmatpush.bf16.msra.mxu0 0
        %586 = vmatpush.bf16.msra.mxu0 0
        %587 = vmatpush.bf16.msra.mxu0 %v578
        %588 = vmatmul.bf16.gmra.mxu0 %v574
        %v589 = vpop.f32.mrf.mxu0
        %v590 = vadd.f32 0.0, %v589
        %v591 = vpop.f32.mrf.mxu0
        %v592 = vadd.f32 0.0, %v591
        %593 = vdwg.mxu0
        %v594 = vld [vmem:[#allocation4] sm:$0xff]
        %v595 = vpack.c.bf16 %v594, %v594
        %v598 = vunpack.c.l.b16 %v359
        %v599 = vunpack.c.l.b16 %v360
        %v600 = vpack.c.b16 %v599, %v598
        %v602 = vsel %vm565, %v600, 0
        %v605 = vsel %vm576, %v595, 0
        %607 = vmatpush.bf16.msra.mxu0 0
        %608 = vmatpush.bf16.msra.mxu0 0
        %609 = vmatpush.bf16.msra.mxu0 0
        %610 = vmatpush.bf16.msra.mxu0 0
        %611 = vmatpush.bf16.msra.mxu0 0
        %612 = vmatpush.bf16.msra.mxu0 0
        %613 = vmatpush.bf16.msra.mxu0 0
        %614 = vmatpush.bf16.msra.mxu0 %v605
        %615 = vmatmul.bf16.gmra.mxu0 %v602
        %v616 = vpop.f32.mrf.mxu0
        %v617 = vadd.f32 0.0, %v616
        %v618 = vpop.f32.mrf.mxu0
        %v619 = vadd.f32 0.0, %v618
        %620 = vdwg.mxu0
        %v621 = vadd.f32 %v590, %v617
        %v622 = vadd.f32 %v592, %v619
        %vm623 = vcmp.gt.f32.partialorder %v621, 0.0
        %vm624 = vcmp.gt.f32.partialorder %v622, 0.0
        %v625 = vmul.f32 %v621, 0.01
        %v626 = vmul.f32 %v622, 0.01
        %v627 = vsel %vm623, %v621, %v625
        %v628 = vsel %vm624, %v622, %v626
        %v629 = vmul.f32 %v627, 1.442695
        %v630 = vpow.pop %v629
        %v631 = vmul.f32 %v628, 1.442695
        %v632 = vpow.pop %v631
        %vm633 = vcmp.eq.f32.partialorder %v590, 0.0
        %vm634 = vcmp.eq.f32.partialorder %v592, 0.0
        %v635 = vsel %vm633, 1.0, %v590
        %v636 = vsel %vm634, 1.0, %v592
        %v637 = vrcp.pop %v635
        %v638 = vrcp.pop %v636
        %641 = vrot.lane.b32.xlu0 %v637, 124
        %v642 = vpop.permute.xlu0 %641
        %643 = vrot.lane.b32.xlu0 %v638, 124
        %v644 = vpop.permute.xlu0 %643
        %v647 = vmul.f32 %v630, %v642
        %v648 = vmul.f32 %v632, %v644
        %650 = vset.pattern.permute.xlu0 0
        %651 = vperm.xlu0 %650, %v647
        %v652 = vpop.permute.xlu0 %651
        %655 = vset.pattern.permute.xlu0 0
        %656 = vperm.xlu0 %655, %v648
        %v657 = vpop.permute.xlu0 %656
        %v659 = vmul.f32 %v590, %v652
        %v660 = vmul.f32 %v592, %v657
        %661 = vset.pattern.permute.xlu0 1
        %662 = vperm.xlu0 %661, %v647
        %v663 = vpop.permute.xlu0 %662
        %665 = vset.pattern.permute.xlu0 1
        %666 = vperm.xlu0 %665, %v648
        %v667 = vpop.permute.xlu0 %666
        %v669 = vmul.f32 %v590, %v663
        %v670 = vmul.f32 %v592, %v667
        %671 = vset.pattern.permute.xlu0 2
        %672 = vperm.xlu0 %671, %v647
        %v673 = vpop.permute.xlu0 %672
        %675 = vset.pattern.permute.xlu0 2
        %676 = vperm.xlu0 %675, %v648
        %v677 = vpop.permute.xlu0 %676
        %v679 = vmul.f32 %v590, %v673
        %v680 = vmul.f32 %v592, %v677
        %681 = vset.pattern.permute.xlu0 3
        %682 = vperm.xlu0 %681, %v647
        %v683 = vpop.permute.xlu0 %682
        %685 = vset.pattern.permute.xlu0 3
        %686 = vperm.xlu0 %685, %v648
        %v687 = vpop.permute.xlu0 %686
        %v689 = vmul.f32 %v590, %v683
        %v690 = vmul.f32 %v592, %v687
        %693 = vrot.lane.b32.xlu0 %v659, 120
        %v694 = vpop.permute.xlu0 %693
        %695 = vrot.lane.b32.xlu0 %v660, 120
        %v696 = vpop.permute.xlu0 %695
        %701 = vrot.lane.b32.xlu0 %v669, 120
        %v702 = vpop.permute.xlu0 %701
        %703 = vrot.lane.b32.xlu0 %v670, 120
        %v704 = vpop.permute.xlu0 %703
        %709 = vrot.lane.b32.xlu0 %v679, 120
        %v710 = vpop.permute.xlu0 %709
        %711 = vrot.lane.b32.xlu0 %v680, 120
        %v712 = vpop.permute.xlu0 %711
        %717 = vrot.lane.b32.xlu0 %v689, 120
        %v718 = vpop.permute.xlu0 %717
        %719 = vrot.lane.b32.xlu0 %v690, 120
        %v720 = vpop.permute.xlu0 %719
        %v723 = vsel %vm565, %v694, %v702
        %v724 = vsel %vm565, %v696, %v704
        %vm725 = vcmask 130048
        %v726 = vsel %vm725, %v723, %v710
        %v727 = vsel %vm725, %v724, %v712
        %vm728 = vcmask 195584
        %v729 = vsel %vm728, %v726, %v718
        %v730 = vsel %vm728, %v727, %v720
        %v731 = vld [vmem:[#allocation6] sm:$0xff]
        %v732 = vpack.c.bf16 %v730, %v729
        %734 = vxpose.xlu0.c.b16.start [1/8] %v600, 128
        %735 = vxpose.xlu0.c.b16.cont [2/8] 0, 128
        %736 = vxpose.xlu0.c.b16.cont [3/8] 0, 128
        %737 = vxpose.xlu0.c.b16.cont [4/8] 0, 128
        %738 = vxpose.xlu0.c.b16.cont [5/8] 0, 128
        %739 = vxpose.xlu0.c.b16.cont [6/8] 0, 128
        %740 = vxpose.xlu0.c.b16.cont [7/8] 0, 128
        %741 = vxpose.xlu0.c.b16.end [8/8] 0, 128
        %v742 = vpop.trf.xlu0
        %v743 = vpop.trf.xlu0
        %v744 = vpop.trf.xlu0
        %v745 = vpop.trf.xlu0
        %v746 = vpop.trf.xlu0
        %v747 = vpop.trf.xlu0
        %v748 = vpop.trf.xlu0
        %v749 = vpop.trf.xlu0
        %v751 = vsel %vm725, %v742, 0
        %753 = vmatpush.bf16.msra.mxu0 0
        %754 = vmatpush.bf16.msra.mxu0 0
        %755 = vmatpush.bf16.msra.mxu0 0
        %756 = vmatpush.bf16.msra.mxu0 0
        %757 = vmatpush.bf16.msra.mxu0 0
        %758 = vmatpush.bf16.msra.mxu0 0
        %759 = vmatpush.bf16.msra.mxu0 0
        %760 = vmatpush.bf16.msra.mxu0 %v732
        %761 = vmatmul.bf16.gmra.mxu0 %v751
        %v762 = vpop.f32.mrf.mxu0
        %v763 = vadd.f32 0.0, %v762
        %v764 = vpop.f32.mrf.mxu0
        %765 = vdwg.mxu0
        %v766 = vadd.f32 %v731, %v763
        %vm767 = vcmask 261120
        %768 = vst.msk [vmem:[#allocation6] sm:$0xff] %vm767, %v766
      $region72: #{tpu_custom_call.1} parent=55 // pred_fallthru
        _
      %p769 = scmp.eq.s32.totalorder %s24, 2
      %p770 = pnand %p769, %p355
      %p771 = pneg %p770
      // Predicated region
      $region73: #{tpu_custom_call.1} parent=55 // pred_check
        _
      $region74: #{tpu_custom_call.1} parent=55 // pred_check_branch
        %773 = sbr.rel (%p770) target = $region76
      $region75: #{tpu_custom_call.1} parent=55 // pred_region
        %v774 = vld [vmem:[#allocation6] sm:$0xff]
        %v775 = vld [vmem:[%s6] sm:$0xff]
        %v776 = vld [vmem:[%s6 + $0x8] sm:$0xff]
        %v777 = vld [vmem:[%s6 + $0x10] sm:$0xff]
        %v778 = vld [vmem:[%s6 + $0x18] sm:$0xff]
        %v779 = vld [vmem:[%s7] sm:$0x1]
        %v781 = vperm.slane %v779, 0
        %vm783 = vcmask 261120
        %v785 = vsel %vm783, %v774, 0
        %787 = vmatpush.msra.mxu0 0.0
        %788 = vmatpush.msra.mxu0 0.0
        %789 = vmatpush.msra.mxu0 0.0
        %790 = vmatpush.msra.mxu0 0.0
        %791 = vmatpush.msra.mxu0 0.0
        %792 = vmatpush.msra.mxu0 0.0
        %793 = vmatpush.msra.mxu0 0.0
        %794 = vmatpush.msra.mxu0 0.0
        %795 = vmatpush.msra.mxu0 0.0
        %796 = vmatpush.msra.mxu0 0.0
        %797 = vmatpush.msra.mxu0 0.0
        %798 = vmatpush.msra.mxu0 0.0
        %799 = vmatpush.msra.mxu0 %v778
        %800 = vmatpush.msra.mxu0 %v777
        %801 = vmatpush.msra.mxu0 %v776
        %802 = vmatpush.msra.mxu0 %v775
        %803 = vmatmul.f32.gmra.mxu0 %v785
        %v804 = vpop.f32.mrf.mxu0
        %v805 = vadd.f32 %v781, %v804
        %806 = vdwg.mxu0
        %vm807 = vcmask 31744
        %808 = vst.msk [vmem:[#allocation7] sm:$0xff] %vm807, %v805
        %v809 = vld [vmem:[%s8] sm:$0xf]
        %v811 = vsel %vm807, %v805, 0
        %vm813 = vcmask 1043456
        %v815 = vsel %vm813, %v809, 0
        %817 = vmatpush.msra.mxu0 0.0
        %818 = vmatpush.msra.mxu0 0.0
        %819 = vmatpush.msra.mxu0 0.0
        %820 = vmatpush.msra.mxu0 0.0
        %821 = vmatpush.msra.mxu0 0.0
        %822 = vmatpush.msra.mxu0 0.0
        %823 = vmatpush.msra.mxu0 0.0
        %824 = vmatpush.msra.mxu0 0.0
        %825 = vmatpush.msra.mxu0 0.0
        %826 = vmatpush.msra.mxu0 0.0
        %827 = vmatpush.msra.mxu0 0.0
        %828 = vmatpush.msra.mxu0 0.0
        %829 = vmatpush.msra.mxu0 0.0
        %830 = vmatpush.msra.mxu0 0.0
        %831 = vmatpush.msra.mxu0 0.0
        %832 = vmatpush.msra.mxu0 %v815
        %833 = vmatmul.f32.gmra.mxu0 %v811
        %v834 = vpop.f32.mrf.mxu0
        %v835 = vadd.f32 0.0, %v834
        %836 = vdwg.mxu0
        %vm837 = vcmask 7168
        %838 = vst.msk [vmem:[#allocation8] sm:$0xff] %vm837, %v835
        %840 = vrot.lane.b32.xlu0 %v835, 127
        %v841 = vpop.permute.xlu0 %840
        %843 = vst.msk [vmem:[#allocation9] sm:$0xff] %vm837, %v841
        %844 = vst.msk [vmem:[#allocation10] sm:$0xff] %vm837, 0.0
      $region76: #{tpu_custom_call.1} parent=55 // pred_fallthru
        _
      // Predicated region
      $region77: #{tpu_custom_call.1} parent=55 // pred_check
        %p845 = pneg %p769
      $region78: #{tpu_custom_call.1} parent=55 // pred_check_branch
        %847 = sbr.rel (%p845) target = $region80
      $region79: #{tpu_custom_call.1} parent=55 // pred_region
        %v848 = vld [vmem:[#allocation8] sm:$0xff]
        %v849 = vpack.c.bf16 %v848, %v848
        %v850 = vld [vmem:[#allocation9] sm:$0xff]
        %v851 = vpack.c.bf16 %v850, %v850
        %v854 = vunpack.c.l.b16 %v359
        %v855 = vunpack.c.l.b16 %v360
        %v856 = vpack.c.b16 %v855, %v854
        %vm857 = vcmask 64512
        %v859 = vsel %vm857, %v856, 0
        %vm861 = vcmask 1043456
        %v863 = vsel %vm861, %v851, 0
        %865 = vmatpush.bf16.msra.mxu0 0
        %866 = vmatpush.bf16.msra.mxu0 0
        %867 = vmatpush.bf16.msra.mxu0 0
        %868 = vmatpush.bf16.msra.mxu0 0
        %869 = vmatpush.bf16.msra.mxu0 0
        %870 = vmatpush.bf16.msra.mxu0 0
        %871 = vmatpush.bf16.msra.mxu0 0
        %872 = vmatpush.bf16.msra.mxu0 %v863
        %873 = vmatmul.bf16.gmra.mxu0 %v859
        %v874 = vpop.f32.mrf.mxu0
        %v875 = vadd.f32 0.0, %v874
        %v876 = vpop.f32.mrf.mxu0
        %v877 = vadd.f32 0.0, %v876
        %878 = vdwg.mxu0
        %v881 = vunpack.c.l.b16 %v357
        %v882 = vunpack.c.l.b16 %v358
        %v883 = vpack.c.b16 %v882, %v881
        %v885 = vsel %vm857, %v883, 0
        %v888 = vsel %vm861, %v849, 0
        %890 = vmatpush.bf16.msra.mxu0 0
        %891 = vmatpush.bf16.msra.mxu0 0
        %892 = vmatpush.bf16.msra.mxu0 0
        %893 = vmatpush.bf16.msra.mxu0 0
        %894 = vmatpush.bf16.msra.mxu0 0
        %895 = vmatpush.bf16.msra.mxu0 0
        %896 = vmatpush.bf16.msra.mxu0 0
        %897 = vmatpush.bf16.msra.mxu0 %v888
        %898 = vmatmul.bf16.gmra.mxu0 %v885
        %v899 = vpop.f32.mrf.mxu0
        %v900 = vadd.f32 %v875, %v899
        %v901 = vpop.f32.mrf.mxu0
        %v902 = vadd.f32 %v877, %v901
        %903 = vdwg.mxu0
        %vm904 = vcmp.gt.f32.partialorder %v900, 0.0
        %vm905 = vcmp.gt.f32.partialorder %v902, 0.0
        %v906 = vmul.f32 %v900, 0.01
        %v907 = vmul.f32 %v902, 0.01
        %v908 = vsel %vm904, %v900, %v906
        %v909 = vsel %vm905, %v902, %v907
        %v910 = vmul.f32 %v908, 1.442695
        %v911 = vpow.pop %v910
        %v912 = vmul.f32 %v909, 1.442695
        %v913 = vpow.pop %v912
        %v914 = vld [vmem:[#allocation10] sm:$0xff]
        %v915 = vpack.c.bf16 %v913, %v911
        %917 = vxpose.xlu0.c.b16.start [1/8] %v883, 128
        %918 = vxpose.xlu0.c.b16.cont [2/8] 0, 128
        %919 = vxpose.xlu0.c.b16.cont [3/8] 0, 128
        %920 = vxpose.xlu0.c.b16.cont [4/8] 0, 128
        %921 = vxpose.xlu0.c.b16.cont [5/8] 0, 128
        %922 = vxpose.xlu0.c.b16.cont [6/8] 0, 128
        %923 = vxpose.xlu0.c.b16.cont [7/8] 0, 128
        %924 = vxpose.xlu0.c.b16.end [8/8] 0, 128
        %v925 = vpop.trf.xlu0
        %v926 = vpop.trf.xlu0
        %v927 = vpop.trf.xlu0
        %v928 = vpop.trf.xlu0
        %v929 = vpop.trf.xlu0
        %v930 = vpop.trf.xlu0
        %v931 = vpop.trf.xlu0
        %v932 = vpop.trf.xlu0
        %vm933 = vcmask 130048
        %v935 = vsel %vm933, %v925, 0
        %937 = vmatpush.bf16.msra.mxu0 0
        %938 = vmatpush.bf16.msra.mxu0 0
        %939 = vmatpush.bf16.msra.mxu0 0
        %940 = vmatpush.bf16.msra.mxu0 0
        %941 = vmatpush.bf16.msra.mxu0 0
        %942 = vmatpush.bf16.msra.mxu0 0
        %943 = vmatpush.bf16.msra.mxu0 0
        %944 = vmatpush.bf16.msra.mxu0 %v915
        %945 = vmatmul.bf16.gmra.mxu0 %v935
        %v946 = vpop.f32.mrf.mxu0
        %v947 = vadd.f32 0.0, %v946
        %v948 = vpop.f32.mrf.mxu0
        %949 = vdwg.mxu0
        %v950 = vadd.f32 %v914, %v947
        %vm951 = vcmask 7168
        %952 = vst.msk [vmem:[#allocation10] sm:$0xff] %vm951, %v950
      $region80: #{tpu_custom_call.1} parent=55 // pred_fallthru
        _
      %p953 = scmp.eq.s32.totalorder %s24, 3
      %p954 = pnand %p953, %p355
      %p955 = pneg %p954
      // Predicated region
      $region81: #{tpu_custom_call.1} parent=55 // pred_check
        _
      $region82: #{tpu_custom_call.1} parent=55 // pred_check_branch
        %957 = sbr.rel (%p954) target = $region84
      $region83: #{tpu_custom_call.1} parent=55 // pred_region
        %vm958 = vcmask 31744
        %959 = vst.msk [vmem:[#allocation11] sm:$0xff] %vm958, 0.0
      $region84: #{tpu_custom_call.1} parent=55 // pred_fallthru
        _
      // Predicated region
      $region85: #{tpu_custom_call.1} parent=55 // pred_check
        %p960 = pneg %p953
      $region86: #{tpu_custom_call.1} parent=55 // pred_check_branch
        %962 = sbr.rel (%p960) target = $region88
      $region87: #{tpu_custom_call.1} parent=55 // pred_region
        %v963 = vld [vmem:[#allocation8] sm:$0xff]
        %v964 = vld [vmem:[#allocation10] sm:$0xff]
        %v965 = vld [vmem:[#allocation7] sm:$0xff]
        %967 = vrot.lane.b32.xlu0 %v964, 1
        %v968 = vpop.permute.xlu0 %967
        %971 = vrot.lane.b32.xlu0 %v965, 2
        %v972 = vpop.permute.xlu0 %971
        %vm974 = vcmask 7168
        %v975 = vsel %vm974, %v963, %v968
        %vm976 = vcmask 15360
        %v977 = vsel %vm976, %v975, %v972
        %v978 = vpack.c.bf16 %v977, %v977
        %v981 = vunpack.c.l.b16 %v357
        %v982 = vunpack.c.l.b16 %v358
        %v983 = vpack.c.b16 %v982, %v981
        %vm984 = vcmask 64512
        %v986 = vsel %vm984, %v983, 0
        %vm988 = vcmask 1043456
        %v990 = vsel %vm988, %v978, 0
        %992 = vmatpush.bf16.msra.mxu0 0
        %993 = vmatpush.bf16.msra.mxu0 0
        %994 = vmatpush.bf16.msra.mxu0 0
        %995 = vmatpush.bf16.msra.mxu0 0
        %996 = vmatpush.bf16.msra.mxu0 0
        %997 = vmatpush.bf16.msra.mxu0 0
        %998 = vmatpush.bf16.msra.mxu0 0
        %999 = vmatpush.bf16.msra.mxu0 %v990
        %1000 = vmatmul.bf16.gmra.mxu0 %v986
        %v1001 = vpop.f32.mrf.mxu0
        %v1002 = vadd.f32 0.0, %v1001
        %v1003 = vpop.f32.mrf.mxu0
        %v1004 = vadd.f32 0.0, %v1003
        %1005 = vdwg.mxu0
        %v1006 = vld [vmem:[#allocation9] sm:$0xff]
        %v1007 = vpack.c.bf16 %v1006, %v1006
        %v1010 = vunpack.c.l.b16 %v359
        %v1011 = vunpack.c.l.b16 %v360
        %v1012 = vpack.c.b16 %v1011, %v1010
        %v1014 = vsel %vm984, %v1012, 0
        %v1017 = vsel %vm988, %v1007, 0
        %1019 = vmatpush.bf16.msra.mxu0 0
        %1020 = vmatpush.bf16.msra.mxu0 0
        %1021 = vmatpush.bf16.msra.mxu0 0
        %1022 = vmatpush.bf16.msra.mxu0 0
        %1023 = vmatpush.bf16.msra.mxu0 0
        %1024 = vmatpush.bf16.msra.mxu0 0
        %1025 = vmatpush.bf16.msra.mxu0 0
        %1026 = vmatpush.bf16.msra.mxu0 %v1017
        %1027 = vmatmul.bf16.gmra.mxu0 %v1014
        %v1028 = vpop.f32.mrf.mxu0
        %v1029 = vadd.f32 0.0, %v1028
        %v1030 = vpop.f32.mrf.mxu0
        %v1031 = vadd.f32 0.0, %v1030
        %1032 = vdwg.mxu0
        %v1033 = vadd.f32 %v1002, %v1029
        %v1034 = vadd.f32 %v1004, %v1031
        %vm1035 = vcmp.gt.f32.partialorder %v1033, 0.0
        %vm1036 = vcmp.gt.f32.partialorder %v1034, 0.0
        %v1037 = vmul.f32 %v1033, 0.01
        %v1038 = vmul.f32 %v1034, 0.01
        %v1039 = vsel %vm1035, %v1033, %v1037
        %v1040 = vsel %vm1036, %v1034, %v1038
        %v1041 = vmul.f32 %v1039, 1.442695
        %v1042 = vpow.pop %v1041
        %v1043 = vmul.f32 %v1040, 1.442695
        %v1044 = vpow.pop %v1043
        %vm1045 = vcmp.eq.f32.partialorder %v1002, 0.0
        %vm1046 = vcmp.eq.f32.partialorder %v1004, 0.0
        %v1047 = vsel %vm1045, 1.0, %v1002
        %v1048 = vsel %vm1046, 1.0, %v1004
        %v1049 = vrcp.pop %v1047
        %v1050 = vrcp.pop %v1048
        %1053 = vrot.lane.b32.xlu0 %v1049, 127
        %v1054 = vpop.permute.xlu0 %1053
        %1055 = vrot.lane.b32.xlu0 %v1050, 127
        %v1056 = vpop.permute.xlu0 %1055
        %v1059 = vmul.f32 %v1042, %v1054
        %v1060 = vmul.f32 %v1044, %v1056
        %1062 = vset.pattern.permute.xlu0 0
        %1063 = vperm.xlu0 %1062, %v1059
        %v1064 = vpop.permute.xlu0 %1063
        %1067 = vset.pattern.permute.xlu0 0
        %1068 = vperm.xlu0 %1067, %v1060
        %v1069 = vpop.permute.xlu0 %1068
        %v1071 = vmul.f32 %v1002, %v1064
        %v1072 = vmul.f32 %v1004, %v1069
        %v1073 = vld [vmem:[#allocation11] sm:$0xff]
        %v1074 = vpack.c.bf16 %v1072, %v1071
        %1076 = vxpose.xlu0.c.b16.start [1/8] %v1012, 128
        %1077 = vxpose.xlu0.c.b16.cont [2/8] 0, 128
        %1078 = vxpose.xlu0.c.b16.cont [3/8] 0, 128
        %1079 = vxpose.xlu0.c.b16.cont [4/8] 0, 128
        %1080 = vxpose.xlu0.c.b16.cont [5/8] 0, 128
        %1081 = vxpose.xlu0.c.b16.cont [6/8] 0, 128
        %1082 = vxpose.xlu0.c.b16.cont [7/8] 0, 128
        %1083 = vxpose.xlu0.c.b16.end [8/8] 0, 128
        %v1084 = vpop.trf.xlu0
        %v1085 = vpop.trf.xlu0
        %v1086 = vpop.trf.xlu0
        %v1087 = vpop.trf.xlu0
        %v1088 = vpop.trf.xlu0
        %v1089 = vpop.trf.xlu0
        %v1090 = vpop.trf.xlu0
        %v1091 = vpop.trf.xlu0
        %1093 = vrot.lane.b32.xlu0 %v1074, 126
        %v1094 = vpop.permute.xlu0 %1093
        %vm1096 = vcmask 130048
        %v1098 = vsel %vm1096, %v1084, 0
        %1100 = vmatpush.bf16.msra.mxu0 0
        %1101 = vmatpush.bf16.msra.mxu0 0
        %1102 = vmatpush.bf16.msra.mxu0 0
        %1103 = vmatpush.bf16.msra.mxu0 0
        %1104 = vmatpush.bf16.msra.mxu0 0
        %1105 = vmatpush.bf16.msra.mxu0 0
        %1106 = vmatpush.bf16.msra.mxu0 0
        %1107 = vmatpush.bf16.msra.mxu0 %v1094
        %1108 = vmatmul.bf16.gmra.mxu0 %v1098
        %v1109 = vpop.f32.mrf.mxu0
        %v1110 = vadd.f32 0.0, %v1109
        %v1111 = vpop.f32.mrf.mxu0
        %1112 = vdwg.mxu0
        %v1113 = vadd.f32 %v1073, %v1110
        %vm1114 = vcmask 31744
        %1115 = vst.msk [vmem:[#allocation11] sm:$0xff] %vm1114, %v1113
      $region88: #{tpu_custom_call.1} parent=55 // pred_fallthru
        _
      %p1116 = pnand %p953, %p356
      %p1117 = pneg %p1116
      // Predicated region
      $region89: #{tpu_custom_call.1} parent=55 // pred_check
        _
      $region90: #{tpu_custom_call.1} parent=55 // pred_check_branch
        %1119 = sbr.rel (%p1116) target = $region92
      $region91: #{tpu_custom_call.1} parent=55 // pred_region
        %v1120 = vld [vmem:[#allocation11] sm:$0xff]
        %vm1121 = vcmp.gt.f32.partialorder %v1120, 0.0
        %v1122 = vmul.f32 %v1120, 1.442695
        %v1123 = vpow.pop %v1122
        %v1124 = vsub.f32 %v1123, 1.0
        %v1125 = vsel %vm1121, %v1120, %v1124
        %vm1126 = vcmask 31744
        %v1127 = vsel %vm1126, %v1125, -inf
        %1128 = vmax.xlane.f32.xlu0 %v1127
        %v1129 = vpop.xlane.xlu0 %1128
        %v1130 = vsub.f32 %v1125, %v1129
        %v1131 = vmul.f32 %v1130, 1.442695
        %v1132 = vpow.pop %v1131
        %v1133 = vsel %vm1126, %v1132, 0.0
        %1134 = vadd.xlane.f32.xlu0 %v1133
        %v1135 = vpop.xlane.xlu0 %1134
        %v1136 = vrcp.pop %v1135
        %v1137 = vmul.f32 %v1135, %v1136
        %v1138 = vsub.f32 1.0, %v1137
        %v1139 = vmul.f32 %v1136, %v1138
        %v1140 = vadd.f32 %v1136, %v1139
        %vm1141 = vweird.f32 %v1135
        %vm1142 = vweird.f32 %v1136
        %vm1143 = vmor %vm1141, %vm1142
        %v1144 = vsel %vm1143, %v1136, %v1140
        %v1145 = vand.u32 2147483647, %v1135
        %vm1146 = vcmp.eq.f32.partialorder %v1145, 8.507059e+37
        %v1147 = vand.u32 %v1135, 2147483648
        %v1148 = vor.u32 1.1754944e-38, %v1147
        %v1149 = vsel %vm1146, %v1148, %v1144
        %v1150 = vmul.f32 %v1132, %v1149
        %1151 = vst.msk [vmem:[%s9] sm:$0xff] %vm1126, %v1150
      $region92: #{tpu_custom_call.1} parent=55 // pred_fallthru
        _
      // Predicated region
      $region93: #{tpu_custom_call.1} parent=55 // pred_check
        %p1152 = pneg %p244
      $region94: #{tpu_custom_call.1} parent=55 // pred_check_branch
        %1154 = sbr.rel (%p1152) target = $region96
      $region95: #{tpu_custom_call.1} parent=55 // pred_region
        _
      $region96: #{tpu_custom_call.1} parent=55 // pred_fallthru
        _
      // Predicated region
      $region97: #{tpu_custom_call.1} parent=55 // pred_check
        %p1155 = pneg %p244
      $region98: #{tpu_custom_call.1} parent=55 // pred_check_branch
        %1157 = sbr.rel (%p1155) target = $region100
      $region99: #{tpu_custom_call.1} parent=55 // pred_region
        _
      $region100: #{tpu_custom_call.1} parent=55 // pred_fallthru
        _
    $region56: #{tpu_custom_call.1} parent=5 // pred_fallthru
      _
    %p1158 = scmp.le.s32.totalorder 2, %s15
    // Predicated region
    $region101: #{tpu_custom_call.1} parent=5 // pred_check
      %p1159 = pneg %p1158
    $region102: #{tpu_custom_call.1} parent=5 // pred_check_branch
      %1161 = sbr.rel (%p1159) target = $region104
    $region103: #{tpu_custom_call.1} parent=5 // pred_region
      %s1162 = ssub.s32 %s15, 2
    $region104: #{tpu_custom_call.1} parent=5 // pred_fallthru
      _
  $region6: #{tpu_custom_call.1} parent=0 // loop_footer
    %s19 = sadd.s32 1, %s15
  $region7: #{tpu_custom_call.1} parent=0 // loop_footer_branch
    %14 = sbr.rel target = $region3
  $region8: #{tpu_custom_call.1} parent=0 // loop_exit
    _

</llo_original>
